<compile_context>
chip_gen: v7x
topology: tpu7x:2x2x1
jax: 0.10.0
libtpu: 0.0.40
codegen_flags: <defaults>
</compile_context>

<pallas_src>
import functools

import jax
import jax.numpy as jnp
from jax.experimental import pallas as pl
from jax.experimental.pallas import tpu as pltpu

_LANES = 128


# ---------------------------------------------------------------------------
# The single fused forward kernel
# ---------------------------------------------------------------------------
def _fused_forward_kernel(xp_ref, slab_ref, o_ref, patch_ref, *,
                          B, C_conv, N, L_pool, n_fc, n_lin, off):
    def slab(name):
        r, nr, nc = off[name]
        return slab_ref[r:r + nr, 0:nc]

    # ---- merged conv branches + folded BN (scale in weight, shift via the
    #      ones-row of the im2col patch) + ReLU: ONE MXU matmul --------------
    y = jnp.dot(slab("w_conv"), xp_ref[...],
                preferred_element_type=jnp.float32)            # (C_conv, B*L_out)
    y = jnp.maximum(y, 0.0)

    # ---- max_pool1d(4, 4) along the length (lane) axis ---------------------
    # L_out % 4 == 0, so pooling groups never cross batch boundaries.
    yp = jnp.max(y.reshape(C_conv, N // 4, 4), axis=-1)        # (C_conv, B*L_pool)

    # ---- build the (L_pool*C_conv, B) patch for the "linear" conv stage ----
    # (window == pooled length -> exactly one output position per batch).
    for b in range(B):
        for p in range(L_pool):
            n = b * L_pool + p
            patch_ref[p * C_conv:(p + 1) * C_conv, b:b + 1] = yp[:, n:n + 1]
    xlin = patch_ref[...]                                      # (L_pool*C_conv, B)

    # ---- linear conv + folded BN + ReLU; dropout = identity (inference) ----
    z = jnp.dot(slab("w_lin"), xlin, preferred_element_type=jnp.float32)
    z = jnp.maximum(z + slab("t_lin"), 0.0)                    # (C_lin, B)

    # ---- fully-connected stack, batched across the B lanes -----------------
    for i in range(n_fc):
        z = jnp.dot(slab(f"w_fc{i}"), z, preferred_element_type=jnp.float32)
        z = z + slab(f"b_fc{i}")
        if i != n_lin - 1:     # exact (odd) ReLU condition from the PyTorch code
            z = jnp.maximum(z, 0.0)

    o_ref[...] = z                                             # (n_out, B): one store


# ---------------------------------------------------------------------------
# Wrapper-side layout plumbing
# ---------------------------------------------------------------------------
def _build_conv_patches(DNA_x, base, K_u, L_out, KuE1p):
    """im2col: (B, L, E) -> (KuE1p, B*L_out); last real row is all-ones (bias)."""
    B, _, E = DNA_x.shape
    x = DNA_x.astype(jnp.float32)
    win = jnp.stack([x[:, base + k: base + k + L_out, :] for k in range(K_u)],
                    axis=0)                                    # (K_u, B, L_out, E)
    xp = jnp.transpose(win, (0, 3, 1, 2)).reshape(K_u * E, B * L_out)
    ones = jnp.ones((1, B * L_out), jnp.float32)
    xp = jnp.concatenate([xp, ones], axis=0)
    return jnp.pad(xp, ((0, KuE1p - xp.shape[0]), (0, 0)))


def _pack_slab(blocks):
    """Pack small 2D params into one lane-padded f32 slab; return (slab, offsets)."""
    rows, offsets, r = [], {}, 0
    for name, a in blocks:
        a = jnp.asarray(a, jnp.float32)
        assert a.ndim == 2 and a.shape[1] <= _LANES
        nr = a.shape[0]
        nr_pad = -(-nr // 8) * 8
        block = jnp.zeros((nr_pad, _LANES), jnp.float32).at[:nr, :a.shape[1]].set(a)
        rows.append(block)
        offsets[name] = (r, nr, a.shape[1])
        r += nr_pad
    return jnp.concatenate(rows, axis=0), offsets


def simple_cnn_forward(DNA_x, tf_x, prep):
    """Fused SimpleCNN.forward (eval mode).  DNA_x: (B, L, E); returns (B, n_tfs)."""
    del tf_x  # threaded to the base class in PyTorch but never used
    cfg = prep["cfg"]
    B = DNA_x.shape[0]
    n_out = cfg["n_out"]
    N = B * cfg["L_out"]

    xp = _build_conv_patches(DNA_x, cfg["base"], cfg["K_u"], cfg["L_out"],
                             cfg["KuE1p"])
    slab = prep["slab"]

    kern = functools.partial(
        _fused_forward_kernel, B=B, C_conv=cfg["C_conv"], N=N,
        L_pool=cfg["L_pool"], n_fc=cfg["n_fc"], n_lin=cfg["n_lin"],
        off=prep["off"])

    out = pl.pallas_call(
        kern,
        grid=(1,),
        in_specs=[pl.BlockSpec(xp.shape, lambda i: (0, 0)),
                  pl.BlockSpec(slab.shape, lambda i: (0, 0))],
        out_specs=pl.BlockSpec((n_out, B), lambda i: (0, 0)),
        out_shape=jax.ShapeDtypeStruct((n_out, B), jnp.float32),
        scratch_shapes=[pltpu.VMEM((cfg["L_pool"] * cfg["C_conv"], B), jnp.float32)],
        compiler_params=pltpu.CompilerParams(dimension_semantics=("arbitrary",)),
    )(xp, slab)
    # lane-dense (n_out, B) kernel output; transpose is wrapper-side plumbing
    return out.T


# ---------------------------------------------------------------------------
# Parameter construction (deterministic, in-script; no checkpoint load)
# ---------------------------------------------------------------------------
def init_params(key, *, emb_size=8, conv_num=(8, 8), conv_size=(5, 9),
                conv_off=(2, 0), linear_size=(32,), full_size=(32, 16), n_tfs=4):
    eps = 1e-5
    keys = iter(jax.random.split(key, 64))

    def trunc(k, shape, std=0.02):
        return std * jax.random.truncated_normal(k, -2.0, 2.0, shape, jnp.float32)

    def bn_fold(k, c, bias):
        gamma = 1.0 + 0.002 * jax.random.normal(k, (c,), jnp.float32)
        beta = jnp.zeros((c,), jnp.float32)
        # eval-mode BN fold: running_mean=0, running_var=1 after reset
        s = gamma / jnp.sqrt(1.0 + eps)
        t = bias * s + beta
        return s, t

    params = {"conv": [], "conv_off": list(conv_off), "linear": [], "full": []}

    for cn, cs in zip(conv_num, conv_size):
        w = trunc(next(keys), (cn, emb_size, cs))
        b = jnp.zeros((cn,), jnp.float32)
        s, t = bn_fold(next(keys), cn, b)
        params["conv"].append((w, s, t))

    lin_chain = [sum(conv_num)] + list(linear_size)
    for ci, co in zip(lin_chain[:-1], lin_chain[1:]):
        w = trunc(next(keys), (co, ci, 8))
        b = jnp.zeros((co,), jnp.float32)
        s, t = bn_fold(next(keys), co, b)
        params["linear"].append((w, s, t))

    full_chain = list(full_size) + [n_tfs]
    for fi, fo in zip(full_chain[:-1], full_chain[1:]):
        w = trunc(next(keys), (fo, fi))
        b = jnp.zeros((fo,), jnp.float32)
        params["full"].append((w, b))
    return params


def prepare_params(params, seq_len):
    """One-time conversion of PyTorch-style params into the fused-kernel layout."""
    offs = list(params["conv_off"])
    convs = params["conv"]
    E = convs[0][0].shape[1]
    base = min(offs)
    K_u = max(off + w.shape[2] for (w, _, _), off in zip(convs, offs)) - base
    louts = [seq_len - 2 * off - w.shape[2] + 1 for (w, _, _), off in zip(convs, offs)]
    assert len(set(louts)) == 1, "conv branches must produce equal output lengths"
    L_out = louts[0]
    assert L_out % 4 == 0, "max_pool1d(4,4) tiling"
    L_pool = L_out // 4

    # merged zero-padded conv weight; BN scale folded in; shift as extra column
    w_blocks, s_list, t_list = [], [], []
    for (w, s, t), off in zip(convs, offs):
        k_i = w.shape[2]
        lo = off - base
        w_blocks.append(jnp.pad(w, ((0, 0), (0, 0), (lo, K_u - lo - k_i))))
        s_list.append(s)
        t_list.append(t)
    w_comb = jnp.concatenate(w_blocks, axis=0)                 # (C_conv, E, K_u)
    C_conv = w_comb.shape[0]
    s_conv = jnp.concatenate(s_list)
    t_conv = jnp.concatenate(t_list)
    w2 = jnp.transpose(w_comb, (0, 2, 1)).reshape(C_conv, K_u * E) * s_conv[:, None]
    w_conv_aug = jnp.concatenate([w2, t_conv[:, None]], axis=1)  # (C_conv, K_u*E+1)
    KuE1p = -(-(K_u * E + 1) // 8) * 8
    assert KuE1p <= _LANES
    w_conv_aug = jnp.pad(w_conv_aug, ((0, 0), (0, KuE1p - w_conv_aug.shape[1])))

    assert len(params["linear"]) == 1, "fused kernel supports one linear-conv stage"
    wl, sl, tl = params["linear"][0]
    C_lin, c_in, K_lin = wl.shape
    assert c_in == C_conv and K_lin == L_pool
    assert L_pool * C_conv <= _LANES
    # column order j = p*C_conv + c matches the in-kernel patch rows
    w_lin = jnp.transpose(wl, (0, 2, 1)).reshape(C_lin, L_pool * C_conv) * sl[:, None]

    blocks = [("w_conv", w_conv_aug), ("w_lin", w_lin), ("t_lin", tl.reshape(C_lin, 1))]
    for i, (w, b) in enumerate(params["full"]):
        assert w.shape[1] <= _LANES
        blocks.append((f"w_fc{i}", w))
        blocks.append((f"b_fc{i}", b.reshape(-1, 1)))
    slab, off = _pack_slab(blocks)

    cfg = dict(base=base, K_u=K_u, L_out=L_out, L_pool=L_pool, C_conv=C_conv,
               KuE1p=KuE1p, n_fc=len(params["full"]), n_lin=len(params["linear"]),
               n_out=int(params["full"][-1][0].shape[0]))
    return {"cfg": cfg, "slab": slab, "off": off}


# ---------------------------------------------------------------------------
# Pure-JAX reference (eval-mode), for a runtime sanity check
# ---------------------------------------------------------------------------
def reference_forward(DNA_x, params):
    hp = jax.lax.Precision.HIGHEST
    x = jnp.transpose(DNA_x, (0, 2, 1)).astype(jnp.float32)    # (B, E, L)
    L = x.shape[2]
    feats = []
    for (w, s, t), off in zip(params["conv"], params["conv_off"]):
        xi = x[:, :, off:L - off]
        K = w.shape[2]
        Lo = xi.shape[2] - K + 1
        acc = jnp.zeros((x.shape[0], w.shape[0], Lo), jnp.float32)
        for k in range(K):
            acc = acc + jnp.einsum("oi,bil->bol", w[:, :, k], xi[:, :, k:k + Lo],
                                   precision=hp)
        feats.append(jax.nn.relu(acc * s[None, :, None] + t[None, :, None]))
    out = jnp.concatenate(feats, axis=1)
    B_, C_, Lc = out.shape
    out = jnp.max(out.reshape(B_, C_, Lc // 4, 4), axis=-1)    # max_pool1d(4, 4)
    wl, sl, tl = params["linear"][0]
    z = jnp.einsum("oip,bip->bo", wl, out, precision=hp)
    z = jax.nn.relu(z * sl[None, :] + tl[None, :])
    n_lin = len(params["linear"])
    for i, (w, b) in enumerate(params["full"]):
        z = jnp.dot(z, w.T, precision=hp) + b[None, :]
        if i != n_lin - 1:
            z = jax.nn.relu(z)
    return z


if __name__ == "__main__":
    key = jax.random.PRNGKey(0)
    k_in, k_p = jax.random.split(key)

    B, L, E = 2, 40, 8
    DNA_x = jax.random.normal(k_in, (B, L, E), dtype=jnp.float32)
    tf_x = jnp.zeros((B, 4), dtype=jnp.float32)  # unused by the forward pass

    params = init_params(k_p, emb_size=E, conv_num=(8, 8), conv_size=(5, 9),
                         conv_off=(2, 0), linear_size=(32,), full_size=(32, 16),
                         n_tfs=4)
    prep = prepare_params(params, seq_len=L)

    out = simple_cnn_forward(DNA_x, tf_x, prep)
    out = jax.block_until_ready(out)

    assert out.shape == (B, 4), out.shape
    assert bool(jnp.all(jnp.isfinite(out)))
    ref = reference_forward(DNA_x, params)
    assert bool(jnp.allclose(out, ref, atol=2e-5, rtol=2e-2)), \
        float(jnp.max(jnp.abs(out - ref)))
    print("KERNEL_OK")
</pallas_src>

<mosaic_0001>
module attributes {stable_mosaic.version = 11 : i64} {
  func.func @_fused_forward_kernel(%arg0: i32, %arg1: memref<80x64xf32, #tpu.memory_space<vmem>>, %arg2: memref<128x128xf32, #tpu.memory_space<vmem>>, %arg3: memref<4x2xf32, #tpu.memory_space<vmem>>, %arg4: memref<128x2xf32, #tpu.memory_space<vmem>>) attributes {dimension_semantics = [#tpu.dimension_semantics<arbitrary>], iteration_bounds = array<i64: 1>, scalar_prefetch = 0 : i64, scratch_operands = 1 : i64, tpu.core_type = #tpu.core_type<tc>, window_params = [{pipeline_mode = #tpu.pipeline_mode<synchronous>, transform_indices = @transform_0, window_bounds = array<i64: 80, 64>}, {pipeline_mode = #tpu.pipeline_mode<synchronous>, transform_indices = @transform_1, window_bounds = array<i64: 128, 128>}, {pipeline_mode = #tpu.pipeline_mode<synchronous>, transform_indices = @transform_2, window_bounds = array<i64: 4, 2>}]} {
    %c0 = arith.constant 0 : index
    %c0_0 = arith.constant 0 : index
    %0 = vector.load %arg2[%c0, %c0_0] : memref<128x128xf32, #tpu.memory_space<vmem>>, vector<16x80xf32>
    %c0_1 = arith.constant 0 : index
    %c0_2 = arith.constant 0 : index
    %1 = vector.load %arg1[%c0_1, %c0_2] : memref<80x64xf32, #tpu.memory_space<vmem>>, vector<80x64xf32>
    %cst = arith.constant dense<0.000000e+00> : vector<16x64xf32>
    %2 = tpu.matmul %0, %1, %cst {dimension_numbers = #tpu.dot_dimension_numbers<[1], [0], [0], [1], [0, 0, 1, 1], [], []>} : vector<16x80xf32>, vector<80x64xf32>, vector<16x64xf32> -> vector<16x64xf32>
    %cst_3 = arith.constant 0.000000e+00 : f32
    %3 = vector.broadcast %cst_3 : f32 to vector<16x64xf32>
    %4 = arith.maximumf %2, %3 : vector<16x64xf32>
    %5 = vector.shape_cast %4 : vector<16x64xf32> to vector<16x16x4xf32>
    %cst_4 = arith.constant dense<0xFF800000> : vector<16x16xf32>
    %6 = vector.multi_reduction <maximumf>, %5, %cst_4 [2] : vector<16x16x4xf32> to vector<16x16xf32>
    %7 = vector.extract_strided_slice %6 {offsets = [0, 0], sizes = [16, 1], strides = [1, 1]} : vector<16x16xf32> to vector<16x1xf32>
    %c0_5 = arith.constant 0 : index
    %c0_6 = arith.constant 0 : index
    %8 = vector.load %arg4[%c0_5, %c0_6] : memref<128x2xf32, #tpu.memory_space<vmem>>, vector<16x1xf32>
    tpu.vector_store %arg4[%c0_5, %c0_6], %7 {strides = array<i32>} : memref<128x2xf32, #tpu.memory_space<vmem>>, vector<16x1xf32>,
    %9 = vector.extract_strided_slice %6 {offsets = [0, 1], sizes = [16, 1], strides = [1, 1]} : vector<16x16xf32> to vector<16x1xf32>
    %c16 = arith.constant 16 : index
    %c0_7 = arith.constant 0 : index
    %10 = vector.load %arg4[%c16, %c0_7] : memref<128x2xf32, #tpu.memory_space<vmem>>, vector<16x1xf32>
    tpu.vector_store %arg4[%c16, %c0_7], %9 {strides = array<i32>} : memref<128x2xf32, #tpu.memory_space<vmem>>, vector<16x1xf32>,
    %11 = vector.extract_strided_slice %6 {offsets = [0, 2], sizes = [16, 1], strides = [1, 1]} : vector<16x16xf32> to vector<16x1xf32>
    %c32 = arith.constant 32 : index
    %c0_8 = arith.constant 0 : index
    %12 = vector.load %arg4[%c32, %c0_8] : memref<128x2xf32, #tpu.memory_space<vmem>>, vector<16x1xf32>
    tpu.vector_store %arg4[%c32, %c0_8], %11 {strides = array<i32>} : memref<128x2xf32, #tpu.memory_space<vmem>>, vector<16x1xf32>,
    %13 = vector.extract_strided_slice %6 {offsets = [0, 3], sizes = [16, 1], strides = [1, 1]} : vector<16x16xf32> to vector<16x1xf32>
    %c48 = arith.constant 48 : index
    %c0_9 = arith.constant 0 : index
    %14 = vector.load %arg4[%c48, %c0_9] : memref<128x2xf32, #tpu.memory_space<vmem>>, vector<16x1xf32>
    tpu.vector_store %arg4[%c48, %c0_9], %13 {strides = array<i32>} : memref<128x2xf32, #tpu.memory_space<vmem>>, vector<16x1xf32>,
    %15 = vector.extract_strided_slice %6 {offsets = [0, 4], sizes = [16, 1], strides = [1, 1]} : vector<16x16xf32> to vector<16x1xf32>
    %c64 = arith.constant 64 : index
    %c0_10 = arith.constant 0 : index
    %16 = vector.load %arg4[%c64, %c0_10] : memref<128x2xf32, #tpu.memory_space<vmem>>, vector<16x1xf32>
    tpu.vector_store %arg4[%c64, %c0_10], %15 {strides = array<i32>} : memref<128x2xf32, #tpu.memory_space<vmem>>, vector<16x1xf32>,
    %17 = vector.extract_strided_slice %6 {offsets = [0, 5], sizes = [16, 1], strides = [1, 1]} : vector<16x16xf32> to vector<16x1xf32>
    %c80 = arith.constant 80 : index
    %c0_11 = arith.constant 0 : index
    %18 = vector.load %arg4[%c80, %c0_11] : memref<128x2xf32, #tpu.memory_space<vmem>>, vector<16x1xf32>
    tpu.vector_store %arg4[%c80, %c0_11], %17 {strides = array<i32>} : memref<128x2xf32, #tpu.memory_space<vmem>>, vector<16x1xf32>,
    %19 = vector.extract_strided_slice %6 {offsets = [0, 6], sizes = [16, 1], strides = [1, 1]} : vector<16x16xf32> to vector<16x1xf32>
    %c96 = arith.constant 96 : index
    %c0_12 = arith.constant 0 : index
    %20 = vector.load %arg4[%c96, %c0_12] : memref<128x2xf32, #tpu.memory_space<vmem>>, vector<16x1xf32>
    tpu.vector_store %arg4[%c96, %c0_12], %19 {strides = array<i32>} : memref<128x2xf32, #tpu.memory_space<vmem>>, vector<16x1xf32>,
    %21 = vector.extract_strided_slice %6 {offsets = [0, 7], sizes = [16, 1], strides = [1, 1]} : vector<16x16xf32> to vector<16x1xf32>
    %c112 = arith.constant 112 : index
    %c0_13 = arith.constant 0 : index
    %22 = vector.load %arg4[%c112, %c0_13] : memref<128x2xf32, #tpu.memory_space<vmem>>, vector<16x1xf32>
    tpu.vector_store %arg4[%c112, %c0_13], %21 {strides = array<i32>} : memref<128x2xf32, #tpu.memory_space<vmem>>, vector<16x1xf32>,
    %23 = vector.extract_strided_slice %6 {offsets = [0, 8], sizes = [16, 1], strides = [1, 1]} : vector<16x16xf32> to vector<16x1xf32>
    %c0_14 = arith.constant 0 : index
    %c1 = arith.constant 1 : index
    %24 = vector.load %arg4[%c0_14, %c1] : memref<128x2xf32, #tpu.memory_space<vmem>>, vector<16x1xf32>
    tpu.vector_store %arg4[%c0_14, %c1], %23 {strides = array<i32>} : memref<128x2xf32, #tpu.memory_space<vmem>>, vector<16x1xf32>,
    %25 = vector.extract_strided_slice %6 {offsets = [0, 9], sizes = [16, 1], strides = [1, 1]} : vector<16x16xf32> to vector<16x1xf32>
    %c16_15 = arith.constant 16 : index
    %c1_16 = arith.constant 1 : index
    %26 = vector.load %arg4[%c16_15, %c1_16] : memref<128x2xf32, #tpu.memory_space<vmem>>, vector<16x1xf32>
    tpu.vector_store %arg4[%c16_15, %c1_16], %25 {strides = array<i32>} : memref<128x2xf32, #tpu.memory_space<vmem>>, vector<16x1xf32>,
    %27 = vector.extract_strided_slice %6 {offsets = [0, 10], sizes = [16, 1], strides = [1, 1]} : vector<16x16xf32> to vector<16x1xf32>
    %c32_17 = arith.constant 32 : index
    %c1_18 = arith.constant 1 : index
    %28 = vector.load %arg4[%c32_17, %c1_18] : memref<128x2xf32, #tpu.memory_space<vmem>>, vector<16x1xf32>
    tpu.vector_store %arg4[%c32_17, %c1_18], %27 {strides = array<i32>} : memref<128x2xf32, #tpu.memory_space<vmem>>, vector<16x1xf32>,
    %29 = vector.extract_strided_slice %6 {offsets = [0, 11], sizes = [16, 1], strides = [1, 1]} : vector<16x16xf32> to vector<16x1xf32>
    %c48_19 = arith.constant 48 : index
    %c1_20 = arith.constant 1 : index
    %30 = vector.load %arg4[%c48_19, %c1_20] : memref<128x2xf32, #tpu.memory_space<vmem>>, vector<16x1xf32>
    tpu.vector_store %arg4[%c48_19, %c1_20], %29 {strides = array<i32>} : memref<128x2xf32, #tpu.memory_space<vmem>>, vector<16x1xf32>,
    %31 = vector.extract_strided_slice %6 {offsets = [0, 12], sizes = [16, 1], strides = [1, 1]} : vector<16x16xf32> to vector<16x1xf32>
    %c64_21 = arith.constant 64 : index
    %c1_22 = arith.constant 1 : index
    %32 = vector.load %arg4[%c64_21, %c1_22] : memref<128x2xf32, #tpu.memory_space<vmem>>, vector<16x1xf32>
    tpu.vector_store %arg4[%c64_21, %c1_22], %31 {strides = array<i32>} : memref<128x2xf32, #tpu.memory_space<vmem>>, vector<16x1xf32>,
    %33 = vector.extract_strided_slice %6 {offsets = [0, 13], sizes = [16, 1], strides = [1, 1]} : vector<16x16xf32> to vector<16x1xf32>
    %c80_23 = arith.constant 80 : index
    %c1_24 = arith.constant 1 : index
    %34 = vector.load %arg4[%c80_23, %c1_24] : memref<128x2xf32, #tpu.memory_space<vmem>>, vector<16x1xf32>
    tpu.vector_store %arg4[%c80_23, %c1_24], %33 {strides = array<i32>} : memref<128x2xf32, #tpu.memory_space<vmem>>, vector<16x1xf32>,
    %35 = vector.extract_strided_slice %6 {offsets = [0, 14], sizes = [16, 1], strides = [1, 1]} : vector<16x16xf32> to vector<16x1xf32>
    %c96_25 = arith.constant 96 : index
    %c1_26 = arith.constant 1 : index
    %36 = vector.load %arg4[%c96_25, %c1_26] : memref<128x2xf32, #tpu.memory_space<vmem>>, vector<16x1xf32>
    tpu.vector_store %arg4[%c96_25, %c1_26], %35 {strides = array<i32>} : memref<128x2xf32, #tpu.memory_space<vmem>>, vector<16x1xf32>,
    %37 = vector.extract_strided_slice %6 {offsets = [0, 15], sizes = [16, 1], strides = [1, 1]} : vector<16x16xf32> to vector<16x1xf32>
    %c112_27 = arith.constant 112 : index
    %c1_28 = arith.constant 1 : index
    %38 = vector.load %arg4[%c112_27, %c1_28] : memref<128x2xf32, #tpu.memory_space<vmem>>, vector<16x1xf32>
    tpu.vector_store %arg4[%c112_27, %c1_28], %37 {strides = array<i32>} : memref<128x2xf32, #tpu.memory_space<vmem>>, vector<16x1xf32>,
    %c0_29 = arith.constant 0 : index
    %c0_30 = arith.constant 0 : index
    %39 = vector.load %arg4[%c0_29, %c0_30] : memref<128x2xf32, #tpu.memory_space<vmem>>, vector<128x2xf32>
    %c16_31 = arith.constant 16 : index
    %c0_32 = arith.constant 0 : index
    %40 = vector.load %arg2[%c16_31, %c0_32] : memref<128x128xf32, #tpu.memory_space<vmem>>, vector<32x128xf32>
    %cst_33 = arith.constant dense<0.000000e+00> : vector<32x2xf32>
    %41 = tpu.matmul %40, %39, %cst_33 {dimension_numbers = #tpu.dot_dimension_numbers<[1], [0], [0], [1], [0, 0, 1, 1], [], []>} : vector<32x128xf32>, vector<128x2xf32>, vector<32x2xf32> -> vector<32x2xf32>
    %c48_34 = arith.constant 48 : index
    %c0_35 = arith.constant 0 : index
    %42 = vector.load %arg2[%c48_34, %c0_35] : memref<128x128xf32, #tpu.memory_space<vmem>>, vector<32x1xf32>
    %43 = vector.broadcast %42 : vector<32x1xf32> to vector<32x2xf32>
    %44 = arith.addf %41, %43 : vector<32x2xf32>
    %cst_36 = arith.constant 0.000000e+00 : f32
    %45 = vector.broadcast %cst_36 : f32 to vector<32x2xf32>
    %46 = arith.maximumf %44, %45 : vector<32x2xf32>
    %c80_37 = arith.constant 80 : index
    %c0_38 = arith.constant 0 : index
    %47 = vector.load %arg2[%c80_37, %c0_38] : memref<128x128xf32, #tpu.memory_space<vmem>>, vector<16x32xf32>
    %cst_39 = arith.constant dense<0.000000e+00> : vector<16x2xf32>
    %48 = tpu.matmul %47, %46, %cst_39 {dimension_numbers = #tpu.dot_dimension_numbers<[1], [0], [0], [1], [0, 0, 1, 1], [], []>} : vector<16x32xf32>, vector<32x2xf32>, vector<16x2xf32> -> vector<16x2xf32>
    %c96_40 = arith.constant 96 : index
    %c0_41 = arith.constant 0 : index
    %49 = vector.load %arg2[%c96_40, %c0_41] : memref<128x128xf32, #tpu.memory_space<vmem>>, vector<16x1xf32>
    %50 = vector.broadcast %49 : vector<16x1xf32> to vector<16x2xf32>
    %51 = arith.addf %48, %50 : vector<16x2xf32>
    %c112_42 = arith.constant 112 : index
    %c0_43 = arith.constant 0 : index
    %52 = vector.load %arg2[%c112_42, %c0_43] : memref<128x128xf32, #tpu.memory_space<vmem>>, vector<4x16xf32>
    %cst_44 = arith.constant dense<0.000000e+00> : vector<4x2xf32>
    %53 = tpu.matmul %52, %51, %cst_44 {dimension_numbers = #tpu.dot_dimension_numbers<[1], [0], [0], [1], [0, 0, 1, 1], [], []>} : vector<4x16xf32>, vector<16x2xf32>, vector<4x2xf32> -> vector<4x2xf32>
    %c120 = arith.constant 120 : index
    %c0_45 = arith.constant 0 : index
    %54 = vector.load %arg2[%c120, %c0_45] : memref<128x128xf32, #tpu.memory_space<vmem>>, vector<4x1xf32>
    %55 = vector.broadcast %54 : vector<4x1xf32> to vector<4x2xf32>
    %56 = arith.addf %53, %55 : vector<4x2xf32>
    %cst_46 = arith.constant 0.000000e+00 : f32
    %57 = vector.broadcast %cst_46 : f32 to vector<4x2xf32>
    %58 = arith.maximumf %56, %57 : vector<4x2xf32>
    %c0_47 = arith.constant 0 : index
    %c0_48 = arith.constant 0 : index
    %59 = vector.load %arg3[%c0_47, %c0_48] : memref<4x2xf32, #tpu.memory_space<vmem>>, vector<4x2xf32>
    tpu.vector_store %arg3[%c0_47, %c0_48], %58 {strides = array<i32>} : memref<4x2xf32, #tpu.memory_space<vmem>>, vector<4x2xf32>,
    return
  }
  func.func @transform_0(%arg0: i32) -> (i32, i32) {
    %c0_i32 = arith.constant 0 : i32
    %c0_i32_0 = arith.constant 0 : i32
    %c0_i32_1 = arith.constant 0 : i32
    return %c0_i32, %c0_i32_0 : i32, i32
  }
  func.func @transform_1(%arg0: i32) -> (i32, i32) {
    %c0_i32 = arith.constant 0 : i32
    %c0_i32_0 = arith.constant 0 : i32
    %c0_i32_1 = arith.constant 0 : i32
    return %c0_i32, %c0_i32_0 : i32, i32
  }
  func.func @transform_2(%arg0: i32) -> (i32, i32) {
    %c0_i32 = arith.constant 0 : i32
    %c0_i32_0 = arith.constant 0 : i32
    %c0_i32_1 = arith.constant 0 : i32
    return %c0_i32, %c0_i32_0 : i32, i32
  }
}

</mosaic_0001>

<llo_original>
// kernel: tpu_custom_call.1
$region0: #{tpu_custom_call.1}
  #allocation0 [shape = 'u32[]', space=smem, size = 0x4, offset = 0x4, fixed_abs, tag = 'smem constant byte address 0x4 - core index']
  #allocation1 [shape = 'u32[144,128]{1,0:T(1,128)}', space=vmem, size = 0x12000, scoped, tag = 'internal scratch']
  #allocation2 [shape = 'f32[128,2]{1,0:T(8,128)}', space=vmem, size = 0x10000, scoped, tag = 'scratch operand']
  %s0 = inlined_call_operand.vmem [shape: f32[80,64], index: 0, kind: input, shape index: {}]
  %s1 = inlined_call_operand.vmem [shape: f32[128,128], index: 1, kind: input, shape index: {}]
  %s2 = inlined_call_operand.vmem [shape: f32[4,2], index: 2, kind: output, shape index: {}]
  %s3 = sld [smem:[#allocation0]]
  $region18: #{tpu_custom_call.1} parent=0
    _
  %s5 = ssub.s32 1, %s3
  %s6 = scalar_select 0, %s5, %s3
  // Predicated region
  $region2: #{tpu_custom_call.1} parent=0 // pred_check
    _
  $region3: #{tpu_custom_call.1} parent=0 // pred_check_branch
    %8 = sbr.rel (0) target = $region5
  $region4: #{tpu_custom_call.1} parent=0 // pred_region
    _
  $region5: #{tpu_custom_call.1} parent=0 // pred_fallthru
    _
  // Predicated region
  $region6: #{tpu_custom_call.1} parent=0 // pred_check
    _
  $region7: #{tpu_custom_call.1} parent=0 // pred_check_branch
    %10 = sbr.rel (0) target = $region9
  $region8: #{tpu_custom_call.1} parent=0 // pred_region
    _
  $region9: #{tpu_custom_call.1} parent=0 // pred_fallthru
    _
  %v11 = vld [vmem:[%s1] sm:$0xff]
  %v12 = vld [vmem:[%s1 + $0x8] sm:$0xff]
  %v13 = vld [vmem:[%s0] sm:$0xff]
  %v14 = vld [vmem:[%s0 + $0x8] sm:$0xff]
  %v15 = vld [vmem:[%s0 + $0x10] sm:$0xff]
  %v16 = vld [vmem:[%s0 + $0x18] sm:$0xff]
  %v17 = vld [vmem:[%s0 + $0x20] sm:$0xff]
  %v18 = vld [vmem:[%s0 + $0x28] sm:$0xff]
  %v19 = vld [vmem:[%s0 + $0x30] sm:$0xff]
  %v20 = vld [vmem:[%s0 + $0x38] sm:$0xff]
  %v21 = vld [vmem:[%s0 + $0x40] sm:$0xff]
  %v22 = vld [vmem:[%s0 + $0x48] sm:$0xff]
  %vm23 = vcmask 654336
  %v25 = vsel %vm23, %v11, 0
  %v28 = vsel %vm23, %v12, 0
  %30 = vmatprep.subr.mxu0 0.0
  %31 = vmatpush1.msra.mxu0 %v13
  %32 = vmatprep.subr.mxu0 0.0
  %33 = vmatpush1.msra.mxu0 %v14
  %34 = vmatprep.subr.mxu0 0.0
  %35 = vmatpush1.msra.mxu0 %v15
  %36 = vmatprep.subr.mxu0 0.0
  %37 = vmatpush1.msra.mxu0 %v16
  %38 = vmatprep.subr.mxu0 0.0
  %39 = vmatpush1.msra.mxu0 %v17
  %40 = vmatprep.subr.mxu0 0.0
  %41 = vmatpush1.msra.mxu0 %v18
  %42 = vmatprep.subr.mxu0 0.0
  %43 = vmatpush1.msra.mxu0 %v19
  %44 = vmatprep.subr.mxu0 0.0
  %45 = vmatpush1.msra.mxu0 %v20
  %46 = vmatprep.subr.mxu0 0.0
  %47 = vmatpush1.msra.mxu0 %v21
  %48 = vmatprep.subr.mxu0 0.0
  %49 = vmatpush1.msra.mxu0 %v22
  %50 = vmatprep.subr.mxu0 0.0
  %51 = vmatpush1.msra.mxu0 0.0
  %52 = vmatprep.subr.mxu0 0.0
  %53 = vmatpush1.msra.mxu0 0.0
  %54 = vmatprep.subr.mxu0 0.0
  %55 = vmatpush1.msra.mxu0 0.0
  %56 = vmatprep.subr.mxu0 0.0
  %57 = vmatpush1.msra.mxu0 0.0
  %58 = vmatprep.subr.mxu0 0.0
  %59 = vmatpush1.msra.mxu0 0.0
  %60 = vmatprep.subr.mxu0 0.0
  %61 = vmatpush1.msra.mxu0 0.0
  %62 = vmatprep.subr.mxu0 0.0
  %63 = vmatpush1.msra.mxu0 0.0
  %64 = vmatprep.subr.mxu0 0.0
  %65 = vmatpush1.msra.mxu0 0.0
  %66 = vmatprep.subr.mxu0 0.0
  %67 = vmatpush1.msra.mxu0 0.0
  %68 = vmatprep.subr.mxu0 0.0
  %69 = vmatpush1.msra.mxu0 0.0
  %70 = vmatprep.subr.mxu0 0.0
  %71 = vmatpush1.msra.mxu0 0.0
  %72 = vmatprep.subr.mxu0 0.0
  %73 = vmatpush1.msra.mxu0 0.0
  %74 = vmatprep.subr.mxu0 0.0
  %75 = vmatpush1.msra.mxu0 0.0
  %76 = vmatprep.subr.mxu0 0.0
  %77 = vmatpush1.msra.mxu0 0.0
  %78 = vmatprep.subr.mxu0 0.0
  %79 = vmatpush1.msra.mxu0 0.0
  %80 = vmatprep.subr.mxu0 0.0
  %81 = vmatpush1.msra.mxu0 0.0
  %82 = vmatprep.subr.mxu0 0.0
  %83 = vmatpush1.msra.mxu0 0.0
  %84 = vmatprep.subr.mxu0 0.0
  %85 = vmatpush1.msra.mxu0 0.0
  %86 = vmatprep.subr.mxu0 0.0
  %87 = vmatpush1.msra.mxu0 0.0
  %88 = vmatprep.subr.mxu0 0.0
  %89 = vmatpush1.msra.mxu0 0.0
  %90 = vmatprep.subr.mxu0 0.0
  %91 = vmatpush1.msra.mxu0 0.0
  %92 = vmatprep.subr.mxu0 0.0
  %93 = vmatpush1.msra.mxu0 0.0
  %94 = vmatprep.mubr.f32.mxu0 0.0
  %95 = vmatmul.mubr.f32.gmra.mrb[0].mxu0 %v25
  %v96 = vpop.f32.mrb[0].mxu0
  %v97 = vadd.f32 0.0, %v96
  %v98 = vpop.f32.mrb[0].mxu0
  %99 = vmatprep.mubr.f32.mxu0 0.0
  %100 = vmatmul.mubr.f32.gmra.mrb[0].mxu0 %v28
  %v101 = vpop.f32.mrb[0].mxu0
  %v102 = vadd.f32 0.0, %v101
  %v103 = vpop.f32.mrb[0].mxu0
  %104 = vdwg.mxu0
  %v105 = vmax.f32 %v97, 0.0
  %v106 = vmax.f32 %v102, 0.0
  %109 = vrot.lane.b32.xlu0 %v105, 124
  %v110 = vpop.permute.xlu0 %109
  %111 = vrot.lane.b32.xlu0 %v106, 124
  %v112 = vpop.permute.xlu0 %111
  %115 = vrot.lane.b32.xlu0 %v105, 120
  %v116 = vpop.permute.xlu0 %115
  %117 = vrot.lane.b32.xlu0 %v106, 120
  %v118 = vpop.permute.xlu0 %117
  %121 = vrot.lane.b32.xlu0 %v105, 116
  %v122 = vpop.permute.xlu0 %121
  %123 = vrot.lane.b32.xlu0 %v106, 116
  %v124 = vpop.permute.xlu0 %123
  %127 = vrot.lane.b32.xlu0 %v105, 112
  %v128 = vpop.permute.xlu0 %127
  %129 = vrot.lane.b32.xlu0 %v106, 112
  %v130 = vpop.permute.xlu0 %129
  %133 = vrot.lane.b32.xlu0 %v105, 108
  %v134 = vpop.permute.xlu0 %133
  %135 = vrot.lane.b32.xlu0 %v106, 108
  %v136 = vpop.permute.xlu0 %135
  %139 = vrot.lane.b32.xlu0 %v105, 104
  %v140 = vpop.permute.xlu0 %139
  %141 = vrot.lane.b32.xlu0 %v106, 104
  %v142 = vpop.permute.xlu0 %141
  %145 = vrot.lane.b32.xlu0 %v105, 100
  %v146 = vpop.permute.xlu0 %145
  %147 = vrot.lane.b32.xlu0 %v106, 100
  %v148 = vpop.permute.xlu0 %147
  %151 = vrot.lane.b32.xlu0 %v105, 96
  %v152 = vpop.permute.xlu0 %151
  %153 = vrot.lane.b32.xlu0 %v106, 96
  %v154 = vpop.permute.xlu0 %153
  %157 = vrot.lane.b32.xlu0 %v105, 92
  %v158 = vpop.permute.xlu0 %157
  %159 = vrot.lane.b32.xlu0 %v106, 92
  %v160 = vpop.permute.xlu0 %159
  %163 = vrot.lane.b32.xlu0 %v105, 88
  %v164 = vpop.permute.xlu0 %163
  %165 = vrot.lane.b32.xlu0 %v106, 88
  %v166 = vpop.permute.xlu0 %165
  %169 = vrot.lane.b32.xlu0 %v105, 84
  %v170 = vpop.permute.xlu0 %169
  %171 = vrot.lane.b32.xlu0 %v106, 84
  %v172 = vpop.permute.xlu0 %171
  %175 = vrot.lane.b32.xlu0 %v105, 80
  %v176 = vpop.permute.xlu0 %175
  %177 = vrot.lane.b32.xlu0 %v106, 80
  %v178 = vpop.permute.xlu0 %177
  %181 = vrot.lane.b32.xlu0 %v105, 76
  %v182 = vpop.permute.xlu0 %181
  %183 = vrot.lane.b32.xlu0 %v106, 76
  %v184 = vpop.permute.xlu0 %183
  %187 = vrot.lane.b32.xlu0 %v105, 72
  %v188 = vpop.permute.xlu0 %187
  %189 = vrot.lane.b32.xlu0 %v106, 72
  %v190 = vpop.permute.xlu0 %189
  %193 = vrot.lane.b32.xlu0 %v105, 68
  %v194 = vpop.permute.xlu0 %193
  %195 = vrot.lane.b32.xlu0 %v106, 68
  %v196 = vpop.permute.xlu0 %195
  %v199 = vcombine.low %v105, %v116
  %v200 = vcombine.high %v105, %v116
  %v202 = vunpack.c.l.s4 1983009808
  %v203 = vunpack.c.0.s8 %v202
  %v204 = vlaneseq
  %v205 = vshrl.u32 %v204, 7
  %v206 = vsub.s32 %v203, %v205
  %v207 = vrot.slane %v199, %v206
  %v209 = vunpack.c.l.s4 1983009808
  %v210 = vunpack.c.0.s8 %v209
  %v211 = vlaneseq
  %v212 = vshrl.u32 %v211, 7
  %v213 = vsub.s32 %v210, %v212
  %v214 = vrot.slane %v200, %v213
  %v215 = vcombine.low %v110, %v122
  %v216 = vcombine.high %v110, %v122
  %v218 = vunpack.c.l.s4 1983009808
  %v219 = vunpack.c.0.s8 %v218
  %v220 = vlaneseq
  %v221 = vshrl.u32 %v220, 7
  %v222 = vsub.s32 %v219, %v221
  %v223 = vrot.slane %v215, %v222
  %v225 = vunpack.c.l.s4 1983009808
  %v226 = vunpack.c.0.s8 %v225
  %v227 = vlaneseq
  %v228 = vshrl.u32 %v227, 7
  %v229 = vsub.s32 %v226, %v228
  %v230 = vrot.slane %v216, %v229
  %v231 = vcombine.low %v128, %v140
  %v232 = vcombine.high %v128, %v140
  %v234 = vunpack.c.l.s4 1983009808
  %v235 = vunpack.c.0.s8 %v234
  %v236 = vlaneseq
  %v237 = vshrl.u32 %v236, 7
  %v238 = vsub.s32 %v235, %v237
  %v239 = vrot.slane %v231, %v238
  %v241 = vunpack.c.l.s4 1983009808
  %v242 = vunpack.c.0.s8 %v241
  %v243 = vlaneseq
  %v244 = vshrl.u32 %v243, 7
  %v245 = vsub.s32 %v242, %v244
  %v246 = vrot.slane %v232, %v245
  %v247 = vcombine.low %v134, %v146
  %v248 = vcombine.high %v134, %v146
  %v250 = vunpack.c.l.s4 1983009808
  %v251 = vunpack.c.0.s8 %v250
  %v252 = vlaneseq
  %v253 = vshrl.u32 %v252, 7
  %v254 = vsub.s32 %v251, %v253
  %v255 = vrot.slane %v247, %v254
  %v257 = vunpack.c.l.s4 1983009808
  %v258 = vunpack.c.0.s8 %v257
  %v259 = vlaneseq
  %v260 = vshrl.u32 %v259, 7
  %v261 = vsub.s32 %v258, %v260
  %v262 = vrot.slane %v248, %v261
  %v263 = vcombine.low %v207, %v223
  %v264 = vcombine.high %v207, %v223
  %v266 = vunpack.c.l.s4 1934713408
  %v267 = vunpack.c.0.s8 %v266
  %v268 = vlaneseq
  %v269 = vshrl.u32 %v268, 7
  %v270 = vsub.s32 %v267, %v269
  %v271 = vrot.slane %v263, %v270
  %v273 = vunpack.c.l.s4 1934713408
  %v274 = vunpack.c.0.s8 %v273
  %v275 = vlaneseq
  %v276 = vshrl.u32 %v275, 7
  %v277 = vsub.s32 %v274, %v276
  %v278 = vrot.slane %v264, %v277
  %v279 = vcombine.low %v214, %v230
  %v280 = vcombine.high %v214, %v230
  %v282 = vunpack.c.l.s4 1934713408
  %v283 = vunpack.c.0.s8 %v282
  %v284 = vlaneseq
  %v285 = vshrl.u32 %v284, 7
  %v286 = vsub.s32 %v283, %v285
  %v287 = vrot.slane %v279, %v286
  %v289 = vunpack.c.l.s4 1934713408
  %v290 = vunpack.c.0.s8 %v289
  %v291 = vlaneseq
  %v292 = vshrl.u32 %v291, 7
  %v293 = vsub.s32 %v290, %v292
  %v294 = vrot.slane %v280, %v293
  %v295 = vcombine.low %v239, %v255
  %v296 = vcombine.high %v239, %v255
  %v298 = vunpack.c.l.s4 1934713408
  %v299 = vunpack.c.0.s8 %v298
  %v300 = vlaneseq
  %v301 = vshrl.u32 %v300, 7
  %v302 = vsub.s32 %v299, %v301
  %v303 = vrot.slane %v295, %v302
  %v305 = vunpack.c.l.s4 1934713408
  %v306 = vunpack.c.0.s8 %v305
  %v307 = vlaneseq
  %v308 = vshrl.u32 %v307, 7
  %v309 = vsub.s32 %v306, %v308
  %v310 = vrot.slane %v296, %v309
  %v311 = vcombine.low %v246, %v262
  %v312 = vcombine.high %v246, %v262
  %v314 = vunpack.c.l.s4 1934713408
  %v315 = vunpack.c.0.s8 %v314
  %v316 = vlaneseq
  %v317 = vshrl.u32 %v316, 7
  %v318 = vsub.s32 %v315, %v317
  %v319 = vrot.slane %v311, %v318
  %v321 = vunpack.c.l.s4 1934713408
  %v322 = vunpack.c.0.s8 %v321
  %v323 = vlaneseq
  %v324 = vshrl.u32 %v323, 7
  %v325 = vsub.s32 %v322, %v324
  %v326 = vrot.slane %v312, %v325
  %v327 = vcombine.low %v271, %v303
  %v328 = vcombine.high %v271, %v303
  %v329 = vcombine.low %v278, %v310
  %v330 = vcombine.high %v278, %v310
  %v331 = vcombine.low %v287, %v319
  %v332 = vcombine.high %v287, %v319
  %v333 = vcombine.low %v294, %v326
  %v334 = vcombine.high %v294, %v326
  %v335 = vcombine.low %v152, %v164
  %v336 = vcombine.high %v152, %v164
  %v338 = vunpack.c.l.s4 1983009808
  %v339 = vunpack.c.0.s8 %v338
  %v340 = vlaneseq
  %v341 = vshrl.u32 %v340, 7
  %v342 = vsub.s32 %v339, %v341
  %v343 = vrot.slane %v335, %v342
  %v345 = vunpack.c.l.s4 1983009808
  %v346 = vunpack.c.0.s8 %v345
  %v347 = vlaneseq
  %v348 = vshrl.u32 %v347, 7
  %v349 = vsub.s32 %v346, %v348
  %v350 = vrot.slane %v336, %v349
  %v351 = vcombine.low %v158, %v170
  %v352 = vcombine.high %v158, %v170
  %v354 = vunpack.c.l.s4 1983009808
  %v355 = vunpack.c.0.s8 %v354
  %v356 = vlaneseq
  %v357 = vshrl.u32 %v356, 7
  %v358 = vsub.s32 %v355, %v357
  %v359 = vrot.slane %v351, %v358
  %v361 = vunpack.c.l.s4 1983009808
  %v362 = vunpack.c.0.s8 %v361
  %v363 = vlaneseq
  %v364 = vshrl.u32 %v363, 7
  %v365 = vsub.s32 %v362, %v364
  %v366 = vrot.slane %v352, %v365
  %v367 = vcombine.low %v176, %v188
  %v368 = vcombine.high %v176, %v188
  %v370 = vunpack.c.l.s4 1983009808
  %v371 = vunpack.c.0.s8 %v370
  %v372 = vlaneseq
  %v373 = vshrl.u32 %v372, 7
  %v374 = vsub.s32 %v371, %v373
  %v375 = vrot.slane %v367, %v374
  %v377 = vunpack.c.l.s4 1983009808
  %v378 = vunpack.c.0.s8 %v377
  %v379 = vlaneseq
  %v380 = vshrl.u32 %v379, 7
  %v381 = vsub.s32 %v378, %v380
  %v382 = vrot.slane %v368, %v381
  %v383 = vcombine.low %v182, %v194
  %v384 = vcombine.high %v182, %v194
  %v386 = vunpack.c.l.s4 1983009808
  %v387 = vunpack.c.0.s8 %v386
  %v388 = vlaneseq
  %v389 = vshrl.u32 %v388, 7
  %v390 = vsub.s32 %v387, %v389
  %v391 = vrot.slane %v383, %v390
  %v393 = vunpack.c.l.s4 1983009808
  %v394 = vunpack.c.0.s8 %v393
  %v395 = vlaneseq
  %v396 = vshrl.u32 %v395, 7
  %v397 = vsub.s32 %v394, %v396
  %v398 = vrot.slane %v384, %v397
  %v399 = vcombine.low %v343, %v359
  %v400 = vcombine.high %v343, %v359
  %v402 = vunpack.c.l.s4 1934713408
  %v403 = vunpack.c.0.s8 %v402
  %v404 = vlaneseq
  %v405 = vshrl.u32 %v404, 7
  %v406 = vsub.s32 %v403, %v405
  %v407 = vrot.slane %v399, %v406
  %v409 = vunpack.c.l.s4 1934713408
  %v410 = vunpack.c.0.s8 %v409
  %v411 = vlaneseq
  %v412 = vshrl.u32 %v411, 7
  %v413 = vsub.s32 %v410, %v412
  %v414 = vrot.slane %v400, %v413
  %v415 = vcombine.low %v350, %v366
  %v416 = vcombine.high %v350, %v366
  %v418 = vunpack.c.l.s4 1934713408
  %v419 = vunpack.c.0.s8 %v418
  %v420 = vlaneseq
  %v421 = vshrl.u32 %v420, 7
  %v422 = vsub.s32 %v419, %v421
  %v423 = vrot.slane %v415, %v422
  %v425 = vunpack.c.l.s4 1934713408
  %v426 = vunpack.c.0.s8 %v425
  %v427 = vlaneseq
  %v428 = vshrl.u32 %v427, 7
  %v429 = vsub.s32 %v426, %v428
  %v430 = vrot.slane %v416, %v429
  %v431 = vcombine.low %v375, %v391
  %v432 = vcombine.high %v375, %v391
  %v434 = vunpack.c.l.s4 1934713408
  %v435 = vunpack.c.0.s8 %v434
  %v436 = vlaneseq
  %v437 = vshrl.u32 %v436, 7
  %v438 = vsub.s32 %v435, %v437
  %v439 = vrot.slane %v431, %v438
  %v441 = vunpack.c.l.s4 1934713408
  %v442 = vunpack.c.0.s8 %v441
  %v443 = vlaneseq
  %v444 = vshrl.u32 %v443, 7
  %v445 = vsub.s32 %v442, %v444
  %v446 = vrot.slane %v432, %v445
  %v447 = vcombine.low %v382, %v398
  %v448 = vcombine.high %v382, %v398
  %v450 = vunpack.c.l.s4 1934713408
  %v451 = vunpack.c.0.s8 %v450
  %v452 = vlaneseq
  %v453 = vshrl.u32 %v452, 7
  %v454 = vsub.s32 %v451, %v453
  %v455 = vrot.slane %v447, %v454
  %v457 = vunpack.c.l.s4 1934713408
  %v458 = vunpack.c.0.s8 %v457
  %v459 = vlaneseq
  %v460 = vshrl.u32 %v459, 7
  %v461 = vsub.s32 %v458, %v460
  %v462 = vrot.slane %v448, %v461
  %v463 = vcombine.low %v407, %v439
  %v464 = vcombine.high %v407, %v439
  %v465 = vcombine.low %v414, %v446
  %v466 = vcombine.high %v414, %v446
  %v467 = vcombine.low %v423, %v455
  %v468 = vcombine.high %v423, %v455
  %v469 = vcombine.low %v430, %v462
  %v470 = vcombine.high %v430, %v462
  %v471 = vcombine.low %v106, %v118
  %v472 = vcombine.high %v106, %v118
  %v474 = vunpack.c.l.s4 1983009808
  %v475 = vunpack.c.0.s8 %v474
  %v476 = vlaneseq
  %v477 = vshrl.u32 %v476, 7
  %v478 = vsub.s32 %v475, %v477
  %v479 = vrot.slane %v471, %v478
  %v481 = vunpack.c.l.s4 1983009808
  %v482 = vunpack.c.0.s8 %v481
  %v483 = vlaneseq
  %v484 = vshrl.u32 %v483, 7
  %v485 = vsub.s32 %v482, %v484
  %v486 = vrot.slane %v472, %v485
  %v487 = vcombine.low %v112, %v124
  %v488 = vcombine.high %v112, %v124
  %v490 = vunpack.c.l.s4 1983009808
  %v491 = vunpack.c.0.s8 %v490
  %v492 = vlaneseq
  %v493 = vshrl.u32 %v492, 7
  %v494 = vsub.s32 %v491, %v493
  %v495 = vrot.slane %v487, %v494
  %v497 = vunpack.c.l.s4 1983009808
  %v498 = vunpack.c.0.s8 %v497
  %v499 = vlaneseq
  %v500 = vshrl.u32 %v499, 7
  %v501 = vsub.s32 %v498, %v500
  %v502 = vrot.slane %v488, %v501
  %v503 = vcombine.low %v130, %v142
  %v504 = vcombine.high %v130, %v142
  %v506 = vunpack.c.l.s4 1983009808
  %v507 = vunpack.c.0.s8 %v506
  %v508 = vlaneseq
  %v509 = vshrl.u32 %v508, 7
  %v510 = vsub.s32 %v507, %v509
  %v511 = vrot.slane %v503, %v510
  %v513 = vunpack.c.l.s4 1983009808
  %v514 = vunpack.c.0.s8 %v513
  %v515 = vlaneseq
  %v516 = vshrl.u32 %v515, 7
  %v517 = vsub.s32 %v514, %v516
  %v518 = vrot.slane %v504, %v517
  %v519 = vcombine.low %v136, %v148
  %v520 = vcombine.high %v136, %v148
  %v522 = vunpack.c.l.s4 1983009808
  %v523 = vunpack.c.0.s8 %v522
  %v524 = vlaneseq
  %v525 = vshrl.u32 %v524, 7
  %v526 = vsub.s32 %v523, %v525
  %v527 = vrot.slane %v519, %v526
  %v529 = vunpack.c.l.s4 1983009808
  %v530 = vunpack.c.0.s8 %v529
  %v531 = vlaneseq
  %v532 = vshrl.u32 %v531, 7
  %v533 = vsub.s32 %v530, %v532
  %v534 = vrot.slane %v520, %v533
  %v535 = vcombine.low %v479, %v495
  %v536 = vcombine.high %v479, %v495
  %v538 = vunpack.c.l.s4 1934713408
  %v539 = vunpack.c.0.s8 %v538
  %v540 = vlaneseq
  %v541 = vshrl.u32 %v540, 7
  %v542 = vsub.s32 %v539, %v541
  %v543 = vrot.slane %v535, %v542
  %v545 = vunpack.c.l.s4 1934713408
  %v546 = vunpack.c.0.s8 %v545
  %v547 = vlaneseq
  %v548 = vshrl.u32 %v547, 7
  %v549 = vsub.s32 %v546, %v548
  %v550 = vrot.slane %v536, %v549
  %v551 = vcombine.low %v486, %v502
  %v552 = vcombine.high %v486, %v502
  %v554 = vunpack.c.l.s4 1934713408
  %v555 = vunpack.c.0.s8 %v554
  %v556 = vlaneseq
  %v557 = vshrl.u32 %v556, 7
  %v558 = vsub.s32 %v555, %v557
  %v559 = vrot.slane %v551, %v558
  %v561 = vunpack.c.l.s4 1934713408
  %v562 = vunpack.c.0.s8 %v561
  %v563 = vlaneseq
  %v564 = vshrl.u32 %v563, 7
  %v565 = vsub.s32 %v562, %v564
  %v566 = vrot.slane %v552, %v565
  %v567 = vcombine.low %v511, %v527
  %v568 = vcombine.high %v511, %v527
  %v570 = vunpack.c.l.s4 1934713408
  %v571 = vunpack.c.0.s8 %v570
  %v572 = vlaneseq
  %v573 = vshrl.u32 %v572, 7
  %v574 = vsub.s32 %v571, %v573
  %v575 = vrot.slane %v567, %v574
  %v577 = vunpack.c.l.s4 1934713408
  %v578 = vunpack.c.0.s8 %v577
  %v579 = vlaneseq
  %v580 = vshrl.u32 %v579, 7
  %v581 = vsub.s32 %v578, %v580
  %v582 = vrot.slane %v568, %v581
  %v583 = vcombine.low %v518, %v534
  %v584 = vcombine.high %v518, %v534
  %v586 = vunpack.c.l.s4 1934713408
  %v587 = vunpack.c.0.s8 %v586
  %v588 = vlaneseq
  %v589 = vshrl.u32 %v588, 7
  %v590 = vsub.s32 %v587, %v589
  %v591 = vrot.slane %v583, %v590
  %v593 = vunpack.c.l.s4 1934713408
  %v594 = vunpack.c.0.s8 %v593
  %v595 = vlaneseq
  %v596 = vshrl.u32 %v595, 7
  %v597 = vsub.s32 %v594, %v596
  %v598 = vrot.slane %v584, %v597
  %v599 = vcombine.low %v543, %v575
  %v600 = vcombine.high %v543, %v575
  %v601 = vcombine.low %v550, %v582
  %v602 = vcombine.high %v550, %v582
  %v603 = vcombine.low %v559, %v591
  %v604 = vcombine.high %v559, %v591
  %v605 = vcombine.low %v566, %v598
  %v606 = vcombine.high %v566, %v598
  %v607 = vcombine.low %v154, %v166
  %v608 = vcombine.high %v154, %v166
  %v610 = vunpack.c.l.s4 1983009808
  %v611 = vunpack.c.0.s8 %v610
  %v612 = vlaneseq
  %v613 = vshrl.u32 %v612, 7
  %v614 = vsub.s32 %v611, %v613
  %v615 = vrot.slane %v607, %v614
  %v617 = vunpack.c.l.s4 1983009808
  %v618 = vunpack.c.0.s8 %v617
  %v619 = vlaneseq
  %v620 = vshrl.u32 %v619, 7
  %v621 = vsub.s32 %v618, %v620
  %v622 = vrot.slane %v608, %v621
  %v623 = vcombine.low %v160, %v172
  %v624 = vcombine.high %v160, %v172
  %v626 = vunpack.c.l.s4 1983009808
  %v627 = vunpack.c.0.s8 %v626
  %v628 = vlaneseq
  %v629 = vshrl.u32 %v628, 7
  %v630 = vsub.s32 %v627, %v629
  %v631 = vrot.slane %v623, %v630
  %v633 = vunpack.c.l.s4 1983009808
  %v634 = vunpack.c.0.s8 %v633
  %v635 = vlaneseq
  %v636 = vshrl.u32 %v635, 7
  %v637 = vsub.s32 %v634, %v636
  %v638 = vrot.slane %v624, %v637
  %v639 = vcombine.low %v178, %v190
  %v640 = vcombine.high %v178, %v190
  %v642 = vunpack.c.l.s4 1983009808
  %v643 = vunpack.c.0.s8 %v642
  %v644 = vlaneseq
  %v645 = vshrl.u32 %v644, 7
  %v646 = vsub.s32 %v643, %v645
  %v647 = vrot.slane %v639, %v646
  %v649 = vunpack.c.l.s4 1983009808
  %v650 = vunpack.c.0.s8 %v649
  %v651 = vlaneseq
  %v652 = vshrl.u32 %v651, 7
  %v653 = vsub.s32 %v650, %v652
  %v654 = vrot.slane %v640, %v653
  %v655 = vcombine.low %v184, %v196
  %v656 = vcombine.high %v184, %v196
  %v658 = vunpack.c.l.s4 1983009808
  %v659 = vunpack.c.0.s8 %v658
  %v660 = vlaneseq
  %v661 = vshrl.u32 %v660, 7
  %v662 = vsub.s32 %v659, %v661
  %v663 = vrot.slane %v655, %v662
  %v665 = vunpack.c.l.s4 1983009808
  %v666 = vunpack.c.0.s8 %v665
  %v667 = vlaneseq
  %v668 = vshrl.u32 %v667, 7
  %v669 = vsub.s32 %v666, %v668
  %v670 = vrot.slane %v656, %v669
  %v671 = vcombine.low %v615, %v631
  %v672 = vcombine.high %v615, %v631
  %v674 = vunpack.c.l.s4 1934713408
  %v675 = vunpack.c.0.s8 %v674
  %v676 = vlaneseq
  %v677 = vshrl.u32 %v676, 7
  %v678 = vsub.s32 %v675, %v677
  %v679 = vrot.slane %v671, %v678
  %v681 = vunpack.c.l.s4 1934713408
  %v682 = vunpack.c.0.s8 %v681
  %v683 = vlaneseq
  %v684 = vshrl.u32 %v683, 7
  %v685 = vsub.s32 %v682, %v684
  %v686 = vrot.slane %v672, %v685
  %v687 = vcombine.low %v622, %v638
  %v688 = vcombine.high %v622, %v638
  %v690 = vunpack.c.l.s4 1934713408
  %v691 = vunpack.c.0.s8 %v690
  %v692 = vlaneseq
  %v693 = vshrl.u32 %v692, 7
  %v694 = vsub.s32 %v691, %v693
  %v695 = vrot.slane %v687, %v694
  %v697 = vunpack.c.l.s4 1934713408
  %v698 = vunpack.c.0.s8 %v697
  %v699 = vlaneseq
  %v700 = vshrl.u32 %v699, 7
  %v701 = vsub.s32 %v698, %v700
  %v702 = vrot.slane %v688, %v701
  %v703 = vcombine.low %v647, %v663
  %v704 = vcombine.high %v647, %v663
  %v706 = vunpack.c.l.s4 1934713408
  %v707 = vunpack.c.0.s8 %v706
  %v708 = vlaneseq
  %v709 = vshrl.u32 %v708, 7
  %v710 = vsub.s32 %v707, %v709
  %v711 = vrot.slane %v703, %v710
  %v713 = vunpack.c.l.s4 1934713408
  %v714 = vunpack.c.0.s8 %v713
  %v715 = vlaneseq
  %v716 = vshrl.u32 %v715, 7
  %v717 = vsub.s32 %v714, %v716
  %v718 = vrot.slane %v704, %v717
  %v719 = vcombine.low %v654, %v670
  %v720 = vcombine.high %v654, %v670
  %v722 = vunpack.c.l.s4 1934713408
  %v723 = vunpack.c.0.s8 %v722
  %v724 = vlaneseq
  %v725 = vshrl.u32 %v724, 7
  %v726 = vsub.s32 %v723, %v725
  %v727 = vrot.slane %v719, %v726
  %v729 = vunpack.c.l.s4 1934713408
  %v730 = vunpack.c.0.s8 %v729
  %v731 = vlaneseq
  %v732 = vshrl.u32 %v731, 7
  %v733 = vsub.s32 %v730, %v732
  %v734 = vrot.slane %v720, %v733
  %v735 = vcombine.low %v679, %v711
  %v736 = vcombine.high %v679, %v711
  %v737 = vcombine.low %v686, %v718
  %v738 = vcombine.high %v686, %v718
  %v739 = vcombine.low %v695, %v727
  %v740 = vcombine.high %v695, %v727
  %v741 = vcombine.low %v702, %v734
  %v742 = vcombine.high %v702, %v734
  %vm743 = vcmask 31744
  %v744 = vsel %vm743, %v327, -inf
  %745 = vmax.xlane.f32.xlu0 %v744
  %v746 = vpop.xlane.xlu0 %745
  %v747 = vsel %vm743, %v463, -inf
  %748 = vmax.xlane.f32.xlu0 %v747
  %v749 = vpop.xlane.xlu0 %748
  %v750 = vsel %vm743, %v328, -inf
  %751 = vmax.xlane.f32.xlu0 %v750
  %v752 = vpop.xlane.xlu0 %751
  %v753 = vsel %vm743, %v464, -inf
  %754 = vmax.xlane.f32.xlu0 %v753
  %v755 = vpop.xlane.xlu0 %754
  %v756 = vsel %vm743, %v329, -inf
  %757 = vmax.xlane.f32.xlu0 %v756
  %v758 = vpop.xlane.xlu0 %757
  %v759 = vsel %vm743, %v465, -inf
  %760 = vmax.xlane.f32.xlu0 %v759
  %v761 = vpop.xlane.xlu0 %760
  %v762 = vsel %vm743, %v330, -inf
  %763 = vmax.xlane.f32.xlu0 %v762
  %v764 = vpop.xlane.xlu0 %763
  %v765 = vsel %vm743, %v466, -inf
  %766 = vmax.xlane.f32.xlu0 %v765
  %v767 = vpop.xlane.xlu0 %766
  %v768 = vsel %vm743, %v331, -inf
  %769 = vmax.xlane.f32.xlu0 %v768
  %v770 = vpop.xlane.xlu0 %769
  %v771 = vsel %vm743, %v467, -inf
  %772 = vmax.xlane.f32.xlu0 %v771
  %v773 = vpop.xlane.xlu0 %772
  %v774 = vsel %vm743, %v332, -inf
  %775 = vmax.xlane.f32.xlu0 %v774
  %v776 = vpop.xlane.xlu0 %775
  %v777 = vsel %vm743, %v468, -inf
  %778 = vmax.xlane.f32.xlu0 %v777
  %v779 = vpop.xlane.xlu0 %778
  %v780 = vsel %vm743, %v333, -inf
  %781 = vmax.xlane.f32.xlu0 %v780
  %v782 = vpop.xlane.xlu0 %781
  %v783 = vsel %vm743, %v469, -inf
  %784 = vmax.xlane.f32.xlu0 %v783
  %v785 = vpop.xlane.xlu0 %784
  %v786 = vsel %vm743, %v334, -inf
  %787 = vmax.xlane.f32.xlu0 %v786
  %v788 = vpop.xlane.xlu0 %787
  %v789 = vsel %vm743, %v470, -inf
  %790 = vmax.xlane.f32.xlu0 %v789
  %v791 = vpop.xlane.xlu0 %790
  %v792 = vsel %vm743, %v599, -inf
  %793 = vmax.xlane.f32.xlu0 %v792
  %v794 = vpop.xlane.xlu0 %793
  %v795 = vsel %vm743, %v735, -inf
  %796 = vmax.xlane.f32.xlu0 %v795
  %v797 = vpop.xlane.xlu0 %796
  %v798 = vsel %vm743, %v600, -inf
  %799 = vmax.xlane.f32.xlu0 %v798
  %v800 = vpop.xlane.xlu0 %799
  %v801 = vsel %vm743, %v736, -inf
  %802 = vmax.xlane.f32.xlu0 %v801
  %v803 = vpop.xlane.xlu0 %802
  %v804 = vsel %vm743, %v601, -inf
  %805 = vmax.xlane.f32.xlu0 %v804
  %v806 = vpop.xlane.xlu0 %805
  %v807 = vsel %vm743, %v737, -inf
  %808 = vmax.xlane.f32.xlu0 %v807
  %v809 = vpop.xlane.xlu0 %808
  %v810 = vsel %vm743, %v602, -inf
  %811 = vmax.xlane.f32.xlu0 %v810
  %v812 = vpop.xlane.xlu0 %811
  %v813 = vsel %vm743, %v738, -inf
  %814 = vmax.xlane.f32.xlu0 %v813
  %v815 = vpop.xlane.xlu0 %814
  %v816 = vsel %vm743, %v603, -inf
  %817 = vmax.xlane.f32.xlu0 %v816
  %v818 = vpop.xlane.xlu0 %817
  %v819 = vsel %vm743, %v739, -inf
  %820 = vmax.xlane.f32.xlu0 %v819
  %v821 = vpop.xlane.xlu0 %820
  %v822 = vsel %vm743, %v604, -inf
  %823 = vmax.xlane.f32.xlu0 %v822
  %v824 = vpop.xlane.xlu0 %823
  %v825 = vsel %vm743, %v740, -inf
  %826 = vmax.xlane.f32.xlu0 %v825
  %v827 = vpop.xlane.xlu0 %826
  %v828 = vsel %vm743, %v605, -inf
  %829 = vmax.xlane.f32.xlu0 %v828
  %v830 = vpop.xlane.xlu0 %829
  %v831 = vsel %vm743, %v741, -inf
  %832 = vmax.xlane.f32.xlu0 %v831
  %v833 = vpop.xlane.xlu0 %832
  %v834 = vsel %vm743, %v606, -inf
  %835 = vmax.xlane.f32.xlu0 %v834
  %v836 = vpop.xlane.xlu0 %835
  %v837 = vsel %vm743, %v742, -inf
  %838 = vmax.xlane.f32.xlu0 %v837
  %v839 = vpop.xlane.xlu0 %838
  %v856 = vrot.slane %v752, 7
  %vm857 = vcmask 1041409
  %v858 = vsel %vm857, %v856, %v746
  %v859 = vrot.slane %v758, 6
  %vm860 = vcmask 1042434
  %v861 = vsel %vm860, %v859, %v858
  %v862 = vrot.slane %v764, 5
  %vm863 = vcmask 1043459
  %v864 = vsel %vm863, %v862, %v861
  %v865 = vrot.slane %v770, 4
  %vm866 = vcmask 1044484
  %v867 = vsel %vm866, %v865, %v864
  %v868 = vrot.slane %v776, 3
  %vm869 = vcmask 1045509
  %v870 = vsel %vm869, %v868, %v867
  %v871 = vrot.slane %v782, 2
  %vm872 = vcmask 1046534
  %v873 = vsel %vm872, %v871, %v870
  %v874 = vrot.slane %v788, 1
  %vm875 = vcmask 1047559
  %v876 = vsel %vm875, %v874, %v873
  %v877 = vrot.slane %v800, 7
  %v878 = vsel %vm857, %v877, %v794
  %v879 = vrot.slane %v806, 6
  %v880 = vsel %vm860, %v879, %v878
  %v881 = vrot.slane %v812, 5
  %v882 = vsel %vm863, %v881, %v880
  %v883 = vrot.slane %v818, 4
  %v884 = vsel %vm866, %v883, %v882
  %v885 = vrot.slane %v824, 3
  %v886 = vsel %vm869, %v885, %v884
  %v887 = vrot.slane %v830, 2
  %v888 = vsel %vm872, %v887, %v886
  %v889 = vrot.slane %v836, 1
  %v890 = vsel %vm875, %v889, %v888
  %vm893 = vcmask 7168
  %894 = vst.msk [vmem:[#allocation2] sm:$0xff] %vm893, %v876
  %895 = vst.msk [vmem:[#allocation2 + $0x8] sm:$0xff] %vm893, %v890
  %v896 = vsel %vm860, %v856, %v746
  %v897 = vsel %vm863, %v859, %v896
  %v898 = vsel %vm866, %v862, %v897
  %v899 = vsel %vm869, %v865, %v898
  %v900 = vsel %vm872, %v868, %v899
  %v901 = vsel %vm875, %v871, %v900
  %v902 = vsel %vm857, %v794, %v874
  %v903 = vsel %vm860, %v877, %v902
  %v904 = vsel %vm863, %v879, %v903
  %v905 = vsel %vm866, %v881, %v904
  %v906 = vsel %vm869, %v883, %v905
  %v907 = vsel %vm872, %v885, %v906
  %v908 = vsel %vm875, %v887, %v907
  %vm912 = vcmask 7169
  %913 = vst.msk [vmem:[#allocation2 + $0xf] sm:$0xfe] %vm912, %v901
  %914 = vst.msk [vmem:[#allocation2 + $0x17] sm:$0xff] %vm893, %v908
  %vm915 = vcmask 0
  %916 = vst.msk [vmem:[#allocation2 + $0x1f] sm:$0x1] %vm915, %v889
  %v917 = vsel %vm863, %v856, %v746
  %v918 = vsel %vm866, %v859, %v917
  %v919 = vsel %vm869, %v862, %v918
  %v920 = vsel %vm872, %v865, %v919
  %v921 = vsel %vm875, %v868, %v920
  %v922 = vsel %vm857, %v874, %v871
  %v923 = vsel %vm860, %v794, %v922
  %v924 = vsel %vm863, %v877, %v923
  %v925 = vsel %vm866, %v879, %v924
  %v926 = vsel %vm869, %v881, %v925
  %v927 = vsel %vm872, %v883, %v926
  %v928 = vsel %vm875, %v885, %v927
  %v929 = vsel %vm857, %v889, %v887
  %vm933 = vcmask 7170
  %934 = vst.msk [vmem:[#allocation2 + $0x1e] sm:$0xfc] %vm933, %v921
  %935 = vst.msk [vmem:[#allocation2 + $0x26] sm:$0xff] %vm893, %v928
  %vm936 = vcmask 1024
  %937 = vst.msk [vmem:[#allocation2 + $0x2e] sm:$0x3] %vm936, %v929
  %v938 = vsel %vm866, %v856, %v746
  %v939 = vsel %vm869, %v859, %v938
  %v940 = vsel %vm872, %v862, %v939
  %v941 = vsel %vm875, %v865, %v940
  %v942 = vsel %vm857, %v871, %v868
  %v943 = vsel %vm860, %v874, %v942
  %v944 = vsel %vm863, %v794, %v943
  %v945 = vsel %vm866, %v877, %v944
  %v946 = vsel %vm869, %v879, %v945
  %v947 = vsel %vm872, %v881, %v946
  %v948 = vsel %vm875, %v883, %v947
  %v949 = vsel %vm857, %v887, %v885
  %v950 = vsel %vm860, %v889, %v949
  %vm954 = vcmask 7171
  %955 = vst.msk [vmem:[#allocation2 + $0x2d] sm:$0xf8] %vm954, %v941
  %956 = vst.msk [vmem:[#allocation2 + $0x35] sm:$0xff] %vm893, %v948
  %vm957 = vcmask 2048
  %958 = vst.msk [vmem:[#allocation2 + $0x3d] sm:$0x7] %vm957, %v950
  %v959 = vsel %vm869, %v856, %v746
  %v960 = vsel %vm872, %v859, %v959
  %v961 = vsel %vm875, %v862, %v960
  %v962 = vsel %vm857, %v868, %v865
  %v963 = vsel %vm860, %v871, %v962
  %v964 = vsel %vm863, %v874, %v963
  %v965 = vsel %vm866, %v794, %v964
  %v966 = vsel %vm869, %v877, %v965
  %v967 = vsel %vm872, %v879, %v966
  %v968 = vsel %vm875, %v881, %v967
  %v969 = vsel %vm857, %v885, %v883
  %v970 = vsel %vm860, %v887, %v969
  %v971 = vsel %vm863, %v889, %v970
  %vm975 = vcmask 7172
  %976 = vst.msk [vmem:[#allocation2 + $0x3c] sm:$0xf0] %vm975, %v961
  %977 = vst.msk [vmem:[#allocation2 + $0x44] sm:$0xff] %vm893, %v968
  %vm978 = vcmask 3072
  %979 = vst.msk [vmem:[#allocation2 + $0x4c] sm:$0xf] %vm978, %v971
  %v980 = vsel %vm872, %v856, %v746
  %v981 = vsel %vm875, %v859, %v980
  %v982 = vsel %vm857, %v865, %v862
  %v983 = vsel %vm860, %v868, %v982
  %v984 = vsel %vm863, %v871, %v983
  %v985 = vsel %vm866, %v874, %v984
  %v986 = vsel %vm869, %v794, %v985
  %v987 = vsel %vm872, %v877, %v986
  %v988 = vsel %vm875, %v879, %v987
  %v989 = vsel %vm857, %v883, %v881
  %v990 = vsel %vm860, %v885, %v989
  %v991 = vsel %vm863, %v887, %v990
  %v992 = vsel %vm866, %v889, %v991
  %vm996 = vcmask 7173
  %997 = vst.msk [vmem:[#allocation2 + $0x4b] sm:$0xe0] %vm996, %v981
  %998 = vst.msk [vmem:[#allocation2 + $0x53] sm:$0xff] %vm893, %v988
  %vm999 = vcmask 4096
  %1000 = vst.msk [vmem:[#allocation2 + $0x5b] sm:$0x1f] %vm999, %v992
  %v1001 = vsel %vm875, %v856, %v746
  %v1002 = vsel %vm857, %v862, %v859
  %v1003 = vsel %vm860, %v865, %v1002
  %v1004 = vsel %vm863, %v868, %v1003
  %v1005 = vsel %vm866, %v871, %v1004
  %v1006 = vsel %vm869, %v874, %v1005
  %v1007 = vsel %vm872, %v794, %v1006
  %v1008 = vsel %vm875, %v877, %v1007
  %v1009 = vsel %vm857, %v881, %v879
  %v1010 = vsel %vm860, %v883, %v1009
  %v1011 = vsel %vm863, %v885, %v1010
  %v1012 = vsel %vm866, %v887, %v1011
  %v1013 = vsel %vm869, %v889, %v1012
  %vm1017 = vcmask 7174
  %1018 = vst.msk [vmem:[#allocation2 + $0x5a] sm:$0xc0] %vm1017, %v1001
  %1019 = vst.msk [vmem:[#allocation2 + $0x62] sm:$0xff] %vm893, %v1008
  %vm1020 = vcmask 5120
  %1021 = vst.msk [vmem:[#allocation2 + $0x6a] sm:$0x3f] %vm1020, %v1013
  %v1022 = vsel %vm857, %v859, %v856
  %v1023 = vsel %vm860, %v862, %v1022
  %v1024 = vsel %vm863, %v865, %v1023
  %v1025 = vsel %vm866, %v868, %v1024
  %v1026 = vsel %vm869, %v871, %v1025
  %v1027 = vsel %vm872, %v874, %v1026
  %v1028 = vsel %vm875, %v794, %v1027
  %v1029 = vsel %vm857, %v879, %v877
  %v1030 = vsel %vm860, %v881, %v1029
  %v1031 = vsel %vm863, %v883, %v1030
  %v1032 = vsel %vm866, %v885, %v1031
  %v1033 = vsel %vm869, %v887, %v1032
  %v1034 = vsel %vm872, %v889, %v1033
  %vm1038 = vcmask 7175
  %1039 = vst.msk [vmem:[#allocation2 + $0x69] sm:$0x80] %vm1038, %v746
  %1040 = vst.msk [vmem:[#allocation2 + $0x71] sm:$0xff] %vm893, %v1028
  %vm1041 = vcmask 6144
  %1042 = vst.msk [vmem:[#allocation2 + $0x79] sm:$0x7f] %vm1041, %v1034
  %v1059 = vrot.slane %v755, 7
  %v1060 = vsel %vm857, %v1059, %v749
  %v1061 = vrot.slane %v761, 6
  %v1062 = vsel %vm860, %v1061, %v1060
  %v1063 = vrot.slane %v767, 5
  %v1064 = vsel %vm863, %v1063, %v1062
  %v1065 = vrot.slane %v773, 4
  %v1066 = vsel %vm866, %v1065, %v1064
  %v1067 = vrot.slane %v779, 3
  %v1068 = vsel %vm869, %v1067, %v1066
  %v1069 = vrot.slane %v785, 2
  %v1070 = vsel %vm872, %v1069, %v1068
  %v1071 = vrot.slane %v791, 1
  %v1072 = vsel %vm875, %v1071, %v1070
  %v1073 = vrot.slane %v803, 7
  %v1074 = vsel %vm857, %v1073, %v797
  %v1075 = vrot.slane %v809, 6
  %v1076 = vsel %vm860, %v1075, %v1074
  %v1077 = vrot.slane %v815, 5
  %v1078 = vsel %vm863, %v1077, %v1076
  %v1079 = vrot.slane %v821, 4
  %v1080 = vsel %vm866, %v1079, %v1078
  %v1081 = vrot.slane %v827, 3
  %v1082 = vsel %vm869, %v1081, %v1080
  %v1083 = vrot.slane %v833, 2
  %v1084 = vsel %vm872, %v1083, %v1082
  %v1085 = vrot.slane %v839, 1
  %v1086 = vsel %vm875, %v1085, %v1084
  %vm1089 = vcmask 15368
  %1090 = vst.msk [vmem:[#allocation2] sm:$0xff] %vm1089, %v1072
  %1091 = vst.msk [vmem:[#allocation2 + $0x8] sm:$0xff] %vm1089, %v1086
  %v1092 = vsel %vm860, %v1059, %v749
  %v1093 = vsel %vm863, %v1061, %v1092
  %v1094 = vsel %vm866, %v1063, %v1093
  %v1095 = vsel %vm869, %v1065, %v1094
  %v1096 = vsel %vm872, %v1067, %v1095
  %v1097 = vsel %vm875, %v1069, %v1096
  %v1098 = vsel %vm857, %v797, %v1071
  %v1099 = vsel %vm860, %v1073, %v1098
  %v1100 = vsel %vm863, %v1075, %v1099
  %v1101 = vsel %vm866, %v1077, %v1100
  %v1102 = vsel %vm869, %v1079, %v1101
  %v1103 = vsel %vm872, %v1081, %v1102
  %v1104 = vsel %vm875, %v1083, %v1103
  %vm1108 = vcmask 15369
  %1109 = vst.msk [vmem:[#allocation2 + $0xf] sm:$0xfe] %vm1108, %v1097
  %1110 = vst.msk [vmem:[#allocation2 + $0x17] sm:$0xff] %vm1089, %v1104
  %vm1111 = vcmask 8200
  %1112 = vst.msk [vmem:[#allocation2 + $0x1f] sm:$0x1] %vm1111, %v1085
  %v1113 = vsel %vm863, %v1059, %v749
  %v1114 = vsel %vm866, %v1061, %v1113
  %v1115 = vsel %vm869, %v1063, %v1114
  %v1116 = vsel %vm872, %v1065, %v1115
  %v1117 = vsel %vm875, %v1067, %v1116
  %v1118 = vsel %vm857, %v1071, %v1069
  %v1119 = vsel %vm860, %v797, %v1118
  %v1120 = vsel %vm863, %v1073, %v1119
  %v1121 = vsel %vm866, %v1075, %v1120
  %v1122 = vsel %vm869, %v1077, %v1121
  %v1123 = vsel %vm872, %v1079, %v1122
  %v1124 = vsel %vm875, %v1081, %v1123
  %v1125 = vsel %vm857, %v1085, %v1083
  %vm1129 = vcmask 15370
  %1130 = vst.msk [vmem:[#allocation2 + $0x1e] sm:$0xfc] %vm1129, %v1117
  %1131 = vst.msk [vmem:[#allocation2 + $0x26] sm:$0xff] %vm1089, %v1124
  %vm1132 = vcmask 9224
  %1133 = vst.msk [vmem:[#allocation2 + $0x2e] sm:$0x3] %vm1132, %v1125
  %v1134 = vsel %vm866, %v1059, %v749
  %v1135 = vsel %vm869, %v1061, %v1134
  %v1136 = vsel %vm872, %v1063, %v1135
  %v1137 = vsel %vm875, %v1065, %v1136
  %v1138 = vsel %vm857, %v1069, %v1067
  %v1139 = vsel %vm860, %v1071, %v1138
  %v1140 = vsel %vm863, %v797, %v1139
  %v1141 = vsel %vm866, %v1073, %v1140
  %v1142 = vsel %vm869, %v1075, %v1141
  %v1143 = vsel %vm872, %v1077, %v1142
  %v1144 = vsel %vm875, %v1079, %v1143
  %v1145 = vsel %vm857, %v1083, %v1081
  %v1146 = vsel %vm860, %v1085, %v1145
  %vm1150 = vcmask 15371
  %1151 = vst.msk [vmem:[#allocation2 + $0x2d] sm:$0xf8] %vm1150, %v1137
  %1152 = vst.msk [vmem:[#allocation2 + $0x35] sm:$0xff] %vm1089, %v1144
  %vm1153 = vcmask 10248
  %1154 = vst.msk [vmem:[#allocation2 + $0x3d] sm:$0x7] %vm1153, %v1146
  %v1155 = vsel %vm869, %v1059, %v749
  %v1156 = vsel %vm872, %v1061, %v1155
  %v1157 = vsel %vm875, %v1063, %v1156
  %v1158 = vsel %vm857, %v1067, %v1065
  %v1159 = vsel %vm860, %v1069, %v1158
  %v1160 = vsel %vm863, %v1071, %v1159
  %v1161 = vsel %vm866, %v797, %v1160
  %v1162 = vsel %vm869, %v1073, %v1161
  %v1163 = vsel %vm872, %v1075, %v1162
  %v1164 = vsel %vm875, %v1077, %v1163
  %v1165 = vsel %vm857, %v1081, %v1079
  %v1166 = vsel %vm860, %v1083, %v1165
  %v1167 = vsel %vm863, %v1085, %v1166
  %vm1171 = vcmask 15372
  %1172 = vst.msk [vmem:[#allocation2 + $0x3c] sm:$0xf0] %vm1171, %v1157
  %1173 = vst.msk [vmem:[#allocation2 + $0x44] sm:$0xff] %vm1089, %v1164
  %vm1174 = vcmask 11272
  %1175 = vst.msk [vmem:[#allocation2 + $0x4c] sm:$0xf] %vm1174, %v1167
  %v1176 = vsel %vm872, %v1059, %v749
  %v1177 = vsel %vm875, %v1061, %v1176
  %v1178 = vsel %vm857, %v1065, %v1063
  %v1179 = vsel %vm860, %v1067, %v1178
  %v1180 = vsel %vm863, %v1069, %v1179
  %v1181 = vsel %vm866, %v1071, %v1180
  %v1182 = vsel %vm869, %v797, %v1181
  %v1183 = vsel %vm872, %v1073, %v1182
  %v1184 = vsel %vm875, %v1075, %v1183
  %v1185 = vsel %vm857, %v1079, %v1077
  %v1186 = vsel %vm860, %v1081, %v1185
  %v1187 = vsel %vm863, %v1083, %v1186
  %v1188 = vsel %vm866, %v1085, %v1187
  %vm1192 = vcmask 15373
  %1193 = vst.msk [vmem:[#allocation2 + $0x4b] sm:$0xe0] %vm1192, %v1177
  %1194 = vst.msk [vmem:[#allocation2 + $0x53] sm:$0xff] %vm1089, %v1184
  %vm1195 = vcmask 12296
  %1196 = vst.msk [vmem:[#allocation2 + $0x5b] sm:$0x1f] %vm1195, %v1188
  %v1197 = vsel %vm875, %v1059, %v749
  %v1198 = vsel %vm857, %v1063, %v1061
  %v1199 = vsel %vm860, %v1065, %v1198
  %v1200 = vsel %vm863, %v1067, %v1199
  %v1201 = vsel %vm866, %v1069, %v1200
  %v1202 = vsel %vm869, %v1071, %v1201
  %v1203 = vsel %vm872, %v797, %v1202
  %v1204 = vsel %vm875, %v1073, %v1203
  %v1205 = vsel %vm857, %v1077, %v1075
  %v1206 = vsel %vm860, %v1079, %v1205
  %v1207 = vsel %vm863, %v1081, %v1206
  %v1208 = vsel %vm866, %v1083, %v1207
  %v1209 = vsel %vm869, %v1085, %v1208
  %vm1213 = vcmask 15374
  %1214 = vst.msk [vmem:[#allocation2 + $0x5a] sm:$0xc0] %vm1213, %v1197
  %1215 = vst.msk [vmem:[#allocation2 + $0x62] sm:$0xff] %vm1089, %v1204
  %vm1216 = vcmask 13320
  %1217 = vst.msk [vmem:[#allocation2 + $0x6a] sm:$0x3f] %vm1216, %v1209
  %v1218 = vsel %vm857, %v1061, %v1059
  %v1219 = vsel %vm860, %v1063, %v1218
  %v1220 = vsel %vm863, %v1065, %v1219
  %v1221 = vsel %vm866, %v1067, %v1220
  %v1222 = vsel %vm869, %v1069, %v1221
  %v1223 = vsel %vm872, %v1071, %v1222
  %v1224 = vsel %vm875, %v797, %v1223
  %v1225 = vsel %vm857, %v1075, %v1073
  %v1226 = vsel %vm860, %v1077, %v1225
  %v1227 = vsel %vm863, %v1079, %v1226
  %v1228 = vsel %vm866, %v1081, %v1227
  %v1229 = vsel %vm869, %v1083, %v1228
  %v1230 = vsel %vm872, %v1085, %v1229
  %vm1234 = vcmask 15375
  %1235 = vst.msk [vmem:[#allocation2 + $0x69] sm:$0x80] %vm1234, %v749
  %1236 = vst.msk [vmem:[#allocation2 + $0x71] sm:$0xff] %vm1089, %v1224
  %vm1237 = vcmask 14344
  %1238 = vst.msk [vmem:[#allocation2 + $0x79] sm:$0x7f] %vm1237, %v1230
  %v1239 = vld [vmem:[#allocation2] sm:$0xff]
  %v1240 = vld [vmem:[#allocation2 + $0x8] sm:$0xff]
  %v1241 = vld [vmem:[#allocation2 + $0x10] sm:$0xff]
  %v1242 = vld [vmem:[#allocation2 + $0x18] sm:$0xff]
  %v1243 = vld [vmem:[#allocation2 + $0x20] sm:$0xff]
  %v1244 = vld [vmem:[#allocation2 + $0x28] sm:$0xff]
  %v1245 = vld [vmem:[#allocation2 + $0x30] sm:$0xff]
  %v1246 = vld [vmem:[#allocation2 + $0x38] sm:$0xff]
  %v1247 = vld [vmem:[#allocation2 + $0x40] sm:$0xff]
  %v1248 = vld [vmem:[#allocation2 + $0x48] sm:$0xff]
  %v1249 = vld [vmem:[#allocation2 + $0x50] sm:$0xff]
  %v1250 = vld [vmem:[#allocation2 + $0x58] sm:$0xff]
  %v1251 = vld [vmem:[#allocation2 + $0x60] sm:$0xff]
  %v1252 = vld [vmem:[#allocation2 + $0x68] sm:$0xff]
  %v1253 = vld [vmem:[#allocation2 + $0x70] sm:$0xff]
  %v1254 = vld [vmem:[#allocation2 + $0x78] sm:$0xff]
  %v1255 = vld [vmem:[%s1 + $0x10] sm:$0xff]
  %v1256 = vld [vmem:[%s1 + $0x18] sm:$0xff]
  %v1257 = vld [vmem:[%s1 + $0x20] sm:$0xff]
  %v1258 = vld [vmem:[%s1 + $0x28] sm:$0xff]
  %v1259 = vld [vmem:[%s1 + $0x30] sm:$0xff]
  %v1260 = vld [vmem:[%s1 + $0x38] sm:$0xff]
  %v1261 = vld [vmem:[%s1 + $0x40] sm:$0xff]
  %v1262 = vld [vmem:[%s1 + $0x48] sm:$0xff]
  %1264 = vset.pattern.permute.xlu0 0
  %1265 = vperm.xlu0 %1264, %v1259
  %v1266 = vpop.permute.xlu0 %1265
  %1269 = vset.pattern.permute.xlu0 0
  %1270 = vperm.xlu0 %1269, %v1260
  %v1271 = vpop.permute.xlu0 %1270
  %1274 = vset.pattern.permute.xlu0 0
  %1275 = vperm.xlu0 %1274, %v1261
  %v1276 = vpop.permute.xlu0 %1275
  %1279 = vset.pattern.permute.xlu0 0
  %1280 = vperm.xlu0 %1279, %v1262
  %v1281 = vpop.permute.xlu0 %1280
  %1283 = vmatprep.subr.mxu0 0.0
  %1284 = vmatpush1.msra.mxu0 %v1239
  %1285 = vmatprep.subr.mxu0 0.0
  %1286 = vmatpush1.msra.mxu0 %v1240
  %1287 = vmatprep.subr.mxu0 0.0
  %1288 = vmatpush1.msra.mxu0 %v1241
  %1289 = vmatprep.subr.mxu0 0.0
  %1290 = vmatpush1.msra.mxu0 %v1242
  %1291 = vmatprep.subr.mxu0 0.0
  %1292 = vmatpush1.msra.mxu0 %v1243
  %1293 = vmatprep.subr.mxu0 0.0
  %1294 = vmatpush1.msra.mxu0 %v1244
  %1295 = vmatprep.subr.mxu0 0.0
  %1296 = vmatpush1.msra.mxu0 %v1245
  %1297 = vmatprep.subr.mxu0 0.0
  %1298 = vmatpush1.msra.mxu0 %v1246
  %1299 = vmatprep.subr.mxu0 0.0
  %1300 = vmatpush1.msra.mxu0 %v1247
  %1301 = vmatprep.subr.mxu0 0.0
  %1302 = vmatpush1.msra.mxu0 %v1248
  %1303 = vmatprep.subr.mxu0 0.0
  %1304 = vmatpush1.msra.mxu0 %v1249
  %1305 = vmatprep.subr.mxu0 0.0
  %1306 = vmatpush1.msra.mxu0 %v1250
  %1307 = vmatprep.subr.mxu0 0.0
  %1308 = vmatpush1.msra.mxu0 %v1251
  %1309 = vmatprep.subr.mxu0 0.0
  %1310 = vmatpush1.msra.mxu0 %v1252
  %1311 = vmatprep.subr.mxu0 0.0
  %1312 = vmatpush1.msra.mxu0 %v1253
  %1313 = vmatprep.subr.mxu0 0.0
  %1314 = vmatpush1.msra.mxu0 %v1254
  %1315 = vmatprep.subr.mxu0 0.0
  %1316 = vmatpush1.msra.mxu0 0.0
  %1317 = vmatprep.subr.mxu0 0.0
  %1318 = vmatpush1.msra.mxu0 0.0
  %1319 = vmatprep.subr.mxu0 0.0
  %1320 = vmatpush1.msra.mxu0 0.0
  %1321 = vmatprep.subr.mxu0 0.0
  %1322 = vmatpush1.msra.mxu0 0.0
  %1323 = vmatprep.subr.mxu0 0.0
  %1324 = vmatpush1.msra.mxu0 0.0
  %1325 = vmatprep.subr.mxu0 0.0
  %1326 = vmatpush1.msra.mxu0 0.0
  %1327 = vmatprep.subr.mxu0 0.0
  %1328 = vmatpush1.msra.mxu0 0.0
  %1329 = vmatprep.subr.mxu0 0.0
  %1330 = vmatpush1.msra.mxu0 0.0
  %1331 = vmatprep.subr.mxu0 0.0
  %1332 = vmatpush1.msra.mxu0 0.0
  %1333 = vmatprep.subr.mxu0 0.0
  %1334 = vmatpush1.msra.mxu0 0.0
  %1335 = vmatprep.subr.mxu0 0.0
  %1336 = vmatpush1.msra.mxu0 0.0
  %1337 = vmatprep.subr.mxu0 0.0
  %1338 = vmatpush1.msra.mxu0 0.0
  %1339 = vmatprep.subr.mxu0 0.0
  %1340 = vmatpush1.msra.mxu0 0.0
  %1341 = vmatprep.subr.mxu0 0.0
  %1342 = vmatpush1.msra.mxu0 0.0
  %1343 = vmatprep.subr.mxu0 0.0
  %1344 = vmatpush1.msra.mxu0 0.0
  %1345 = vmatprep.subr.mxu0 0.0
  %1346 = vmatpush1.msra.mxu0 0.0
  %1347 = vmatprep.mubr.f32.mxu0 0.0
  %1348 = vmatmul.mubr.f32.gmra.mrb[0].mxu0 %v1255
  %v1349 = vpop.f32.mrb[0].mxu0
  %v1350 = vadd.f32 %v1266, %v1349
  %v1351 = vpop.f32.mrb[0].mxu0
  %1352 = vmatprep.mubr.f32.mxu0 0.0
  %1353 = vmatmul.mubr.f32.gmra.mrb[0].mxu0 %v1256
  %v1354 = vpop.f32.mrb[0].mxu0
  %v1355 = vadd.f32 %v1271, %v1354
  %v1356 = vpop.f32.mrb[0].mxu0
  %1357 = vmatprep.mubr.f32.mxu0 0.0
  %1358 = vmatmul.mubr.f32.gmra.mrb[0].mxu0 %v1257
  %v1359 = vpop.f32.mrb[0].mxu0
  %v1360 = vadd.f32 %v1276, %v1359
  %v1361 = vpop.f32.mrb[0].mxu0
  %1362 = vmatprep.mubr.f32.mxu0 0.0
  %1363 = vmatmul.mubr.f32.gmra.mrb[0].mxu0 %v1258
  %v1364 = vpop.f32.mrb[0].mxu0
  %v1365 = vadd.f32 %v1281, %v1364
  %v1366 = vpop.f32.mrb[0].mxu0
  %1367 = vdwg.mxu0
  %v1368 = vmax.f32 %v1350, 0.0
  %v1369 = vmax.f32 %v1355, 0.0
  %v1370 = vmax.f32 %v1360, 0.0
  %v1371 = vmax.f32 %v1365, 0.0
  %v1372 = vld [vmem:[%s1 + $0x50] sm:$0xff]
  %v1373 = vld [vmem:[%s1 + $0x58] sm:$0xff]
  %v1374 = vld [vmem:[%s1 + $0x60] sm:$0xff]
  %v1375 = vld [vmem:[%s1 + $0x68] sm:$0xff]
  %1377 = vset.pattern.permute.xlu0 0
  %1378 = vperm.xlu0 %1377, %v1374
  %v1379 = vpop.permute.xlu0 %1378
  %1382 = vset.pattern.permute.xlu0 0
  %1383 = vperm.xlu0 %1382, %v1375
  %v1384 = vpop.permute.xlu0 %1383
  %vm1386 = vcmask 261120
  %v1388 = vsel %vm1386, %v1372, 0
  %v1391 = vsel %vm1386, %v1373, 0
  %1393 = vmatprep.subr.mxu0 0.0
  %1394 = vmatpush1.msra.mxu0 %v1368
  %1395 = vmatprep.subr.mxu0 0.0
  %1396 = vmatpush1.msra.mxu0 %v1369
  %1397 = vmatprep.subr.mxu0 0.0
  %1398 = vmatpush1.msra.mxu0 %v1370
  %1399 = vmatprep.subr.mxu0 0.0
  %1400 = vmatpush1.msra.mxu0 %v1371
  %1401 = vmatprep.subr.mxu0 0.0
  %1402 = vmatpush1.msra.mxu0 0.0
  %1403 = vmatprep.subr.mxu0 0.0
  %1404 = vmatpush1.msra.mxu0 0.0
  %1405 = vmatprep.subr.mxu0 0.0
  %1406 = vmatpush1.msra.mxu0 0.0
  %1407 = vmatprep.subr.mxu0 0.0
  %1408 = vmatpush1.msra.mxu0 0.0
  %1409 = vmatprep.subr.mxu0 0.0
  %1410 = vmatpush1.msra.mxu0 0.0
  %1411 = vmatprep.subr.mxu0 0.0
  %1412 = vmatpush1.msra.mxu0 0.0
  %1413 = vmatprep.subr.mxu0 0.0
  %1414 = vmatpush1.msra.mxu0 0.0
  %1415 = vmatprep.subr.mxu0 0.0
  %1416 = vmatpush1.msra.mxu0 0.0
  %1417 = vmatprep.subr.mxu0 0.0
  %1418 = vmatpush1.msra.mxu0 0.0
  %1419 = vmatprep.subr.mxu0 0.0
  %1420 = vmatpush1.msra.mxu0 0.0
  %1421 = vmatprep.subr.mxu0 0.0
  %1422 = vmatpush1.msra.mxu0 0.0
  %1423 = vmatprep.subr.mxu0 0.0
  %1424 = vmatpush1.msra.mxu0 0.0
  %1425 = vmatprep.subr.mxu0 0.0
  %1426 = vmatpush1.msra.mxu0 0.0
  %1427 = vmatprep.subr.mxu0 0.0
  %1428 = vmatpush1.msra.mxu0 0.0
  %1429 = vmatprep.subr.mxu0 0.0
  %1430 = vmatpush1.msra.mxu0 0.0
  %1431 = vmatprep.subr.mxu0 0.0
  %1432 = vmatpush1.msra.mxu0 0.0
  %1433 = vmatprep.subr.mxu0 0.0
  %1434 = vmatpush1.msra.mxu0 0.0
  %1435 = vmatprep.subr.mxu0 0.0
  %1436 = vmatpush1.msra.mxu0 0.0
  %1437 = vmatprep.subr.mxu0 0.0
  %1438 = vmatpush1.msra.mxu0 0.0
  %1439 = vmatprep.subr.mxu0 0.0
  %1440 = vmatpush1.msra.mxu0 0.0
  %1441 = vmatprep.subr.mxu0 0.0
  %1442 = vmatpush1.msra.mxu0 0.0
  %1443 = vmatprep.subr.mxu0 0.0
  %1444 = vmatpush1.msra.mxu0 0.0
  %1445 = vmatprep.subr.mxu0 0.0
  %1446 = vmatpush1.msra.mxu0 0.0
  %1447 = vmatprep.subr.mxu0 0.0
  %1448 = vmatpush1.msra.mxu0 0.0
  %1449 = vmatprep.subr.mxu0 0.0
  %1450 = vmatpush1.msra.mxu0 0.0
  %1451 = vmatprep.subr.mxu0 0.0
  %1452 = vmatpush1.msra.mxu0 0.0
  %1453 = vmatprep.subr.mxu0 0.0
  %1454 = vmatpush1.msra.mxu0 0.0
  %1455 = vmatprep.subr.mxu0 0.0
  %1456 = vmatpush1.msra.mxu0 0.0
  %1457 = vmatprep.mubr.f32.mxu0 0.0
  %1458 = vmatmul.mubr.f32.gmra.mrb[0].mxu0 %v1388
  %v1459 = vpop.f32.mrb[0].mxu0
  %v1460 = vadd.f32 %v1379, %v1459
  %v1461 = vpop.f32.mrb[0].mxu0
  %1462 = vmatprep.mubr.f32.mxu0 0.0
  %1463 = vmatmul.mubr.f32.gmra.mrb[0].mxu0 %v1391
  %v1464 = vpop.f32.mrb[0].mxu0
  %v1465 = vadd.f32 %v1384, %v1464
  %v1466 = vpop.f32.mrb[0].mxu0
  %1467 = vdwg.mxu0
  %v1468 = vld [vmem:[%s1 + $0x70] sm:$0xf]
  %v1469 = vld [vmem:[%s1 + $0x78] sm:$0xf]
  %1471 = vset.pattern.permute.xlu0 0
  %1472 = vperm.xlu0 %1471, %v1469
  %v1473 = vpop.permute.xlu0 %1472
  %vm1475 = vcmask 130048
  %v1477 = vsel %vm1475, %v1468, 0
  %1479 = vmatprep.subr.mxu0 0.0
  %1480 = vmatpush1.msra.mxu0 %v1460
  %1481 = vmatprep.subr.mxu0 0.0
  %1482 = vmatpush1.msra.mxu0 %v1465
  %1483 = vmatprep.subr.mxu0 0.0
  %1484 = vmatpush1.msra.mxu0 0.0
  %1485 = vmatprep.subr.mxu0 0.0
  %1486 = vmatpush1.msra.mxu0 0.0
  %1487 = vmatprep.subr.mxu0 0.0
  %1488 = vmatpush1.msra.mxu0 0.0
  %1489 = vmatprep.subr.mxu0 0.0
  %1490 = vmatpush1.msra.mxu0 0.0
  %1491 = vmatprep.subr.mxu0 0.0
  %1492 = vmatpush1.msra.mxu0 0.0
  %1493 = vmatprep.subr.mxu0 0.0
  %1494 = vmatpush1.msra.mxu0 0.0
  %1495 = vmatprep.subr.mxu0 0.0
  %1496 = vmatpush1.msra.mxu0 0.0
  %1497 = vmatprep.subr.mxu0 0.0
  %1498 = vmatpush1.msra.mxu0 0.0
  %1499 = vmatprep.subr.mxu0 0.0
  %1500 = vmatpush1.msra.mxu0 0.0
  %1501 = vmatprep.subr.mxu0 0.0
  %1502 = vmatpush1.msra.mxu0 0.0
  %1503 = vmatprep.subr.mxu0 0.0
  %1504 = vmatpush1.msra.mxu0 0.0
  %1505 = vmatprep.subr.mxu0 0.0
  %1506 = vmatpush1.msra.mxu0 0.0
  %1507 = vmatprep.subr.mxu0 0.0
  %1508 = vmatpush1.msra.mxu0 0.0
  %1509 = vmatprep.subr.mxu0 0.0
  %1510 = vmatpush1.msra.mxu0 0.0
  %1511 = vmatprep.subr.mxu0 0.0
  %1512 = vmatpush1.msra.mxu0 0.0
  %1513 = vmatprep.subr.mxu0 0.0
  %1514 = vmatpush1.msra.mxu0 0.0
  %1515 = vmatprep.subr.mxu0 0.0
  %1516 = vmatpush1.msra.mxu0 0.0
  %1517 = vmatprep.subr.mxu0 0.0
  %1518 = vmatpush1.msra.mxu0 0.0
  %1519 = vmatprep.subr.mxu0 0.0
  %1520 = vmatpush1.msra.mxu0 0.0
  %1521 = vmatprep.subr.mxu0 0.0
  %1522 = vmatpush1.msra.mxu0 0.0
  %1523 = vmatprep.subr.mxu0 0.0
  %1524 = vmatpush1.msra.mxu0 0.0
  %1525 = vmatprep.subr.mxu0 0.0
  %1526 = vmatpush1.msra.mxu0 0.0
  %1527 = vmatprep.subr.mxu0 0.0
  %1528 = vmatpush1.msra.mxu0 0.0
  %1529 = vmatprep.subr.mxu0 0.0
  %1530 = vmatpush1.msra.mxu0 0.0
  %1531 = vmatprep.subr.mxu0 0.0
  %1532 = vmatpush1.msra.mxu0 0.0
  %1533 = vmatprep.subr.mxu0 0.0
  %1534 = vmatpush1.msra.mxu0 0.0
  %1535 = vmatprep.subr.mxu0 0.0
  %1536 = vmatpush1.msra.mxu0 0.0
  %1537 = vmatprep.subr.mxu0 0.0
  %1538 = vmatpush1.msra.mxu0 0.0
  %1539 = vmatprep.subr.mxu0 0.0
  %1540 = vmatpush1.msra.mxu0 0.0
  %1541 = vmatprep.subr.mxu0 0.0
  %1542 = vmatpush1.msra.mxu0 0.0
  %1543 = vmatprep.mubr.f32.mxu0 0.0
  %1544 = vmatmul.mubr.f32.gmra.mrb[0].mxu0 %v1477
  %v1545 = vpop.f32.mrb[0].mxu0
  %v1546 = vadd.f32 %v1473, %v1545
  %v1547 = vpop.f32.mrb[0].mxu0
  %1548 = vdwg.mxu0
  %v1549 = vmax.f32 %v1546, 0.0
  %vm1550 = vcmask 11264
  %1551 = vst.msk [vmem:[%s2] sm:$0xf] %vm1550, %v1549
  // Predicated region
  $region10: #{tpu_custom_call.1} parent=0 // pred_check
    _
  $region11: #{tpu_custom_call.1} parent=0 // pred_check_branch
    %1553 = sbr.rel (0) target = $region13
  $region12: #{tpu_custom_call.1} parent=0 // pred_region
    _
  $region13: #{tpu_custom_call.1} parent=0 // pred_fallthru
    _
  // Predicated region
  $region14: #{tpu_custom_call.1} parent=0 // pred_check
    _
  $region15: #{tpu_custom_call.1} parent=0 // pred_check_branch
    %1555 = sbr.rel (0) target = $region17
  $region16: #{tpu_custom_call.1} parent=0 // pred_region
    _
  $region17: #{tpu_custom_call.1} parent=0 // pred_fallthru
    _

</llo_original>
